<compile_context>
chip_gen: v7x
topology: tpu7x:2x2x1
jax: 0.10.0
libtpu: 0.0.40
codegen_flags: <defaults>
</compile_context>

<pallas_src>
import jax
import jax.numpy as jnp
from jax import lax
from jax.experimental import pallas as pl
from jax.experimental.pallas import tpu as pltpu

_EPS = 1e-5


def _block_kernel(x_ref,
                  ln1_g_ref, ln1_b_ref,
                  wq_ref, wk_ref, wv_ref,
                  wproj_ref, bproj_ref,
                  ln2_g_ref, ln2_b_ref,
                  w1_ref, b1_ref, w2_ref, b2_ref,
                  out_ref):
    # One grid step == one batch element (leading dim squeezed via BlockSpec).
    x = x_ref[...]                                   # (T, C) f32
    T, C = x.shape
    nh = wq_ref.shape[0]                             # weights are head-split: (nh, C, hs)
    bf16, f32 = jnp.bfloat16, jnp.float32

    # ---------------- LayerNorm 1 (f32) ----------------
    mu1 = jnp.mean(x, axis=-1, keepdims=True)
    var1 = jnp.mean((x - mu1) * (x - mu1), axis=-1, keepdims=True)
    xn1 = (x - mu1) * lax.rsqrt(var1 + _EPS)
    xn1 = xn1 * ln1_g_ref[...] + ln1_b_ref[...]      # (T, C)

    # ------------- Multi-head causal attention -------------
    # Head axis is a batch dim of the dot_generals: no per-head lane slices,
    # no .T transpose, no lane concatenate. bf16 MXU inputs, f32 accumulation.
    xh = jnp.broadcast_to(xn1.astype(bf16)[None, :, :], (nh, T, C))   # (nh, T, C)
    q = jnp.einsum('htc,hcd->htd', xh, wq_ref[...], preferred_element_type=f32)
    k = jnp.einsum('htc,hcd->htd', xh, wk_ref[...], preferred_element_type=f32)
    v = jnp.einsum('htc,hcd->htd', xh, wv_ref[...], preferred_element_type=f32)

    scale = float(C) ** -0.5                         # matches PyTorch `* C ** (-0.5)`
    s = jnp.einsum('hqd,hkd->hqk', q.astype(bf16), k.astype(bf16),
                   preferred_element_type=f32) * scale               # (nh, T, T)
    row = lax.broadcasted_iota(jnp.int32, (nh, T, T), 1)
    col = lax.broadcasted_iota(jnp.int32, (nh, T, T), 2)
    s = jnp.where(col <= row, s, -jnp.inf)           # causal (tril) mask

    s_max = jnp.max(s, axis=-1, keepdims=True)
    p = jnp.exp(s - s_max)                           # f32 softmax (EUP exp)
    p = p * pl.reciprocal(jnp.sum(p, axis=-1, keepdims=True), approx=True)

    o = jnp.einsum('hqk,hkd->hqd', p.astype(bf16), v.astype(bf16),
                   preferred_element_type=f32)       # (nh, T, hs)

    # Output projection folded per head and reduced over heads:
    #   concat_h(o_h) @ Wproj == sum_h o_h @ Wproj[h*hs:(h+1)*hs, :]
    proj = jnp.einsum('htd,hdc->htc', o.astype(bf16), wproj_ref[...],
                      preferred_element_type=f32)    # (nh, T, C)
    attn = jnp.sum(proj, axis=0) + bproj_ref[...]    # (T, C)

    x1 = x + attn                                    # first residual

    # ---------------- LayerNorm 2 (f32) ----------------
    mu2 = jnp.mean(x1, axis=-1, keepdims=True)
    var2 = jnp.mean((x1 - mu2) * (x1 - mu2), axis=-1, keepdims=True)
    xn2 = (x1 - mu2) * lax.rsqrt(var2 + _EPS)
    xn2 = xn2 * ln2_g_ref[...] + ln2_b_ref[...]

    # ---------------- FeedForward ----------------
    # TODO(synk): FeedForward body not shown in spec; standard leon_gpt MLP
    # Linear(C,4C) -> ReLU -> Linear(4C,C) -> Dropout(0) assumed.
    hdn = jnp.dot(xn2.astype(bf16), w1_ref[...],
                  preferred_element_type=f32) + b1_ref[...]
    hdn = jnp.maximum(hdn, 0.0)                      # ReLU
    ff = jnp.dot(hdn.astype(bf16), w2_ref[...],
                 preferred_element_type=f32) + b2_ref[...]

    out_ref[...] = x1 + ff                           # second residual


def block_forward(x, params, num_heads):
    B, T, C = x.shape
    hs = C // num_heads
    H = params["w1"].shape[1]                        # 4*C
    f32, bf16 = jnp.float32, jnp.bfloat16

    # Head-split + bf16 weights, prepared OUTSIDE the kernel so the kernel body
    # needs no lane-dim reshapes/transposes (layout plumbing is done once here).
    split_cols = lambda w: w.reshape(C, num_heads, hs).transpose(1, 0, 2).astype(bf16)
    wq_h = split_cols(params["wq"])                  # (nh, C, hs)
    wk_h = split_cols(params["wk"])
    wv_h = split_cols(params["wv"])
    wproj_h = params["wproj"].reshape(num_heads, hs, C).astype(bf16)   # (nh, hs, C)

    full2 = lambda r, c: pl.BlockSpec((r, c), lambda b: (0, 0))
    full3 = lambda a, r, c: pl.BlockSpec((a, r, c), lambda b: (0, 0, 0))

    # Advisory cost model for the XLA scheduler.
    flops = int(B * (24 * T * C * C + 4 * T * T * C))
    transcendentals = int(B * (num_heads * T * T + num_heads * T + 2 * T))
    bytes_accessed = int(2 * B * T * C * 4 + 12 * C * C * 2 + (6 * C + H) * 4)

    return pl.pallas_call(
        _block_kernel,
        out_shape=jax.ShapeDtypeStruct((B, T, C), f32),
        grid_spec=pltpu.PrefetchScalarGridSpec(
            num_scalar_prefetch=0,
            grid=(B,),
            in_specs=[
                pl.BlockSpec((None, T, C), lambda b: (b, 0, 0)),    # x
                full2(1, C), full2(1, C),                           # ln1 gamma/beta
                full3(num_heads, C, hs),                            # Wq (head-split)
                full3(num_heads, C, hs),                            # Wk
                full3(num_heads, C, hs),                            # Wv
                full3(num_heads, hs, C),                            # Wproj (head-split)
                full2(1, C),                                        # bproj
                full2(1, C), full2(1, C),                           # ln2 gamma/beta
                full2(C, H), full2(1, H),                           # ff W1, b1
                full2(H, C), full2(1, C),                           # ff W2, b2
            ],
            out_specs=pl.BlockSpec((None, T, C), lambda b: (b, 0, 0)),
        ),
        compiler_params=pltpu.CompilerParams(
            dimension_semantics=("parallel",),       # batch steps shard across cores
            vmem_limit_bytes=64 * 1024 * 1024,
        ),
        cost_estimate=pl.CostEstimate(
            flops=flops,
            transcendentals=transcendentals,
            bytes_accessed=bytes_accessed),
    )(x.astype(f32),
      params["ln1_g"], params["ln1_b"],
      wq_h, wk_h, wv_h,
      wproj_h, params["bproj"],
      params["ln2_g"], params["ln2_b"],
      params["w1"].astype(bf16), params["b1"],
      params["w2"].astype(bf16), params["b2"])


def block_reference(x, params, num_heads):
    """Plain-JAX f32 reference mirroring the PyTorch forward (dropout=0)."""
    B, T, C = x.shape
    hs = C // num_heads

    def ln(z, g, b):
        mu = jnp.mean(z, -1, keepdims=True)
        var = jnp.mean((z - mu) ** 2, -1, keepdims=True)
        return (z - mu) / jnp.sqrt(var + _EPS) * g[0] + b[0]

    xn1 = ln(x, params["ln1_g"], params["ln1_b"])
    q = xn1 @ params["wq"]
    k = xn1 @ params["wk"]
    v = xn1 @ params["wv"]
    mask = jnp.tril(jnp.ones((T, T), bool))
    heads = []
    for h in range(num_heads):
        qh, kh, vh = (a[..., h * hs:(h + 1) * hs] for a in (q, k, v))
        s = jnp.einsum("btd,bsd->bts", qh, kh) * C ** -0.5
        s = jnp.where(mask, s, -jnp.inf)
        p = jax.nn.softmax(s, axis=-1)
        heads.append(jnp.einsum("bts,bsd->btd", p, vh))
    attn = jnp.concatenate(heads, -1) @ params["wproj"] + params["bproj"][0]
    x1 = x + attn
    xn2 = ln(x1, params["ln2_g"], params["ln2_b"])
    hdn = jnp.maximum(xn2 @ params["w1"] + params["b1"][0], 0.0)
    return x1 + (hdn @ params["w2"] + params["b2"][0])


def init_params(key, C):
    H = 4 * C
    ks = jax.random.split(key, 6)
    scale = 0.02
    return {
        "ln1_g": jnp.ones((1, C), jnp.float32),
        "ln1_b": jnp.zeros((1, C), jnp.float32),
        "wq": scale * jax.random.normal(ks[0], (C, C), jnp.float32),
        "wk": scale * jax.random.normal(ks[1], (C, C), jnp.float32),
        "wv": scale * jax.random.normal(ks[2], (C, C), jnp.float32),
        "wproj": scale * jax.random.normal(ks[3], (C, C), jnp.float32),
        "bproj": jnp.zeros((1, C), jnp.float32),
        "ln2_g": jnp.ones((1, C), jnp.float32),
        "ln2_b": jnp.zeros((1, C), jnp.float32),
        "w1": scale * jax.random.normal(ks[4], (C, H), jnp.float32),
        "b1": jnp.zeros((1, H), jnp.float32),
        "w2": scale * jax.random.normal(ks[5], (H, C), jnp.float32),
        "b2": jnp.zeros((1, C), jnp.float32),
    }


if __name__ == "__main__":
    B, T, C = 2, 8, 32
    num_heads = 4            # head_size = 8; max_sequence_length >= T assumed

    key = jax.random.PRNGKey(0)
    kx, kp = jax.random.split(key)
    x = jax.random.normal(kx, (B, T, C), jnp.float32)
    params = init_params(kp, C)

    out = jax.block_until_ready(block_forward(x, params, num_heads))
    ref = block_reference(x, params, num_heads)

    assert out.shape == (B, T, C)
    # Kernel uses bf16 MXU inputs with f32 accumulation; vs the pure-f32
    # reference that gives ~1e-3-level differences. 1e-2 still catches any
    # structural (mask / head-mapping / residual) error, which would be O(0.1).
    assert jnp.allclose(out, ref, atol=1e-2, rtol=1e-2), "mismatch vs reference"
    print("KERNEL_OK")
</pallas_src>

<mosaic_0001>
module attributes {stable_mosaic.version = 11 : i64} {
  func.func @_block_kernel(%arg0: i32, %arg1: memref<1x8x32xf32, #tpu.memory_space<vmem>>, %arg2: memref<1x32xf32, #tpu.memory_space<vmem>>, %arg3: memref<1x32xf32, #tpu.memory_space<vmem>>, %arg4: memref<4x32x8xbf16, #tpu.memory_space<vmem>>, %arg5: memref<4x32x8xbf16, #tpu.memory_space<vmem>>, %arg6: memref<4x32x8xbf16, #tpu.memory_space<vmem>>, %arg7: memref<4x8x32xbf16, #tpu.memory_space<vmem>>, %arg8: memref<1x32xf32, #tpu.memory_space<vmem>>, %arg9: memref<1x32xf32, #tpu.memory_space<vmem>>, %arg10: memref<1x32xf32, #tpu.memory_space<vmem>>, %arg11: memref<32x128xbf16, #tpu.memory_space<vmem>>, %arg12: memref<1x128xf32, #tpu.memory_space<vmem>>, %arg13: memref<128x32xbf16, #tpu.memory_space<vmem>>, %arg14: memref<1x32xf32, #tpu.memory_space<vmem>>, %arg15: memref<1x8x32xf32, #tpu.memory_space<vmem>>) attributes {dimension_semantics = [#tpu.dimension_semantics<parallel>], iteration_bounds = array<i64: 2>, scalar_prefetch = 0 : i64, scratch_operands = 0 : i64, tpu.core_type = #tpu.core_type<tc>, window_params = [{transform_indices = @transform_0, window_bounds = array<i64: 1, 8, 32>}, {pipeline_mode = #tpu.pipeline_mode<synchronous>, transform_indices = @transform_1, window_bounds = array<i64: 1, 32>}, {pipeline_mode = #tpu.pipeline_mode<synchronous>, transform_indices = @transform_2, window_bounds = array<i64: 1, 32>}, {pipeline_mode = #tpu.pipeline_mode<synchronous>, transform_indices = @transform_3, window_bounds = array<i64: 4, 32, 8>}, {pipeline_mode = #tpu.pipeline_mode<synchronous>, transform_indices = @transform_4, window_bounds = array<i64: 4, 32, 8>}, {pipeline_mode = #tpu.pipeline_mode<synchronous>, transform_indices = @transform_5, window_bounds = array<i64: 4, 32, 8>}, {pipeline_mode = #tpu.pipeline_mode<synchronous>, transform_indices = @transform_6, window_bounds = array<i64: 4, 8, 32>}, {pipeline_mode = #tpu.pipeline_mode<synchronous>, transform_indices = @transform_7, window_bounds = array<i64: 1, 32>}, {pipeline_mode = #tpu.pipeline_mode<synchronous>, transform_indices = @transform_8, window_bounds = array<i64: 1, 32>}, {pipeline_mode = #tpu.pipeline_mode<synchronous>, transform_indices = @transform_9, window_bounds = array<i64: 1, 32>}, {pipeline_mode = #tpu.pipeline_mode<synchronous>, transform_indices = @transform_10, window_bounds = array<i64: 32, 128>}, {pipeline_mode = #tpu.pipeline_mode<synchronous>, transform_indices = @transform_11, window_bounds = array<i64: 1, 128>}, {pipeline_mode = #tpu.pipeline_mode<synchronous>, transform_indices = @transform_12, window_bounds = array<i64: 128, 32>}, {pipeline_mode = #tpu.pipeline_mode<synchronous>, transform_indices = @transform_13, window_bounds = array<i64: 1, 32>}, {transform_indices = @transform_14, window_bounds = array<i64: 1, 8, 32>}]} {
    %c0 = arith.constant 0 : index
    %c0_0 = arith.constant 0 : index
    %c0_1 = arith.constant 0 : index
    %0 = vector.load %arg1[%c0, %c0_0, %c0_1] : memref<1x8x32xf32, #tpu.memory_space<vmem>>, vector<1x8x32xf32>
    %1 = vector.shape_cast %0 : vector<1x8x32xf32> to vector<8x32xf32>
    %cst = arith.constant dense<0.000000e+00> : vector<8xf32>
    %2 = vector.multi_reduction <add>, %1, %cst [1] : vector<8x32xf32> to vector<8xf32>
    %3 = vector.shape_cast %2 : vector<8xf32> to vector<8x1xf32>
    %cst_2 = arith.constant 3.200000e+01 : f32
    %4 = vector.broadcast %cst_2 : f32 to vector<8x1xf32>
    %5 = arith.divf %3, %4 : vector<8x1xf32>
    %6 = vector.broadcast %5 : vector<8x1xf32> to vector<8x32xf32>
    %7 = arith.subf %1, %6 : vector<8x32xf32>
    %8 = vector.broadcast %5 : vector<8x1xf32> to vector<8x32xf32>
    %9 = arith.subf %1, %8 : vector<8x32xf32>
    %10 = arith.mulf %7, %9 : vector<8x32xf32>
    %cst_3 = arith.constant dense<0.000000e+00> : vector<8xf32>
    %11 = vector.multi_reduction <add>, %10, %cst_3 [1] : vector<8x32xf32> to vector<8xf32>
    %12 = vector.shape_cast %11 : vector<8xf32> to vector<8x1xf32>
    %cst_4 = arith.constant 3.200000e+01 : f32
    %13 = vector.broadcast %cst_4 : f32 to vector<8x1xf32>
    %14 = arith.divf %12, %13 : vector<8x1xf32>
    %15 = vector.broadcast %5 : vector<8x1xf32> to vector<8x32xf32>
    %16 = arith.subf %1, %15 : vector<8x32xf32>
    %cst_5 = arith.constant 9.99999974E-6 : f32
    %17 = vector.broadcast %cst_5 : f32 to vector<8x1xf32>
    %18 = arith.addf %14, %17 : vector<8x1xf32>
    %19 = math.rsqrt %18 : vector<8x1xf32>
    %20 = vector.broadcast %19 : vector<8x1xf32> to vector<8x32xf32>
    %21 = arith.mulf %16, %20 : vector<8x32xf32>
    %c0_6 = arith.constant 0 : index
    %c0_7 = arith.constant 0 : index
    %22 = vector.load %arg2[%c0_6, %c0_7] : memref<1x32xf32, #tpu.memory_space<vmem>>, vector<1x32xf32>
    %23 = vector.broadcast %22 : vector<1x32xf32> to vector<8x32xf32>
    %24 = arith.mulf %21, %23 : vector<8x32xf32>
    %c0_8 = arith.constant 0 : index
    %c0_9 = arith.constant 0 : index
    %25 = vector.load %arg3[%c0_8, %c0_9] : memref<1x32xf32, #tpu.memory_space<vmem>>, vector<1x32xf32>
    %26 = vector.broadcast %25 : vector<1x32xf32> to vector<8x32xf32>
    %27 = arith.addf %24, %26 : vector<8x32xf32>
    %28 = arith.truncf %27 : vector<8x32xf32> to vector<8x32xbf16>
    %29 = vector.shape_cast %28 : vector<8x32xbf16> to vector<1x8x32xbf16>
    %30 = vector.shape_cast %29 : vector<1x8x32xbf16> to vector<1x8x32xbf16>
    %31 = vector.broadcast %30 : vector<1x8x32xbf16> to vector<4x8x32xbf16>
    %c0_10 = arith.constant 0 : index
    %c0_11 = arith.constant 0 : index
    %c0_12 = arith.constant 0 : index
    %32 = vector.load %arg4[%c0_10, %c0_11, %c0_12] : memref<4x32x8xbf16, #tpu.memory_space<vmem>>, vector<4x32x8xbf16>
    "tpu.trace_start"() <{level = 10 : i32, message = "htc,hcd->htd"}> : () -> ()
    %cst_13 = arith.constant dense<0.000000e+00> : vector<4x8x8xf32>
    %33 = tpu.matmul %31, %32, %cst_13 {dimension_numbers = #tpu.dot_dimension_numbers<[2], [1], [1], [2], [0, 0, 0, 1, 1, 2], [0], [0]>} : vector<4x8x32xbf16>, vector<4x32x8xbf16>, vector<4x8x8xf32> -> vector<4x8x8xf32>
    "tpu.trace_stop"() : () -> ()
    %c0_14 = arith.constant 0 : index
    %c0_15 = arith.constant 0 : index
    %c0_16 = arith.constant 0 : index
    %34 = vector.load %arg5[%c0_14, %c0_15, %c0_16] : memref<4x32x8xbf16, #tpu.memory_space<vmem>>, vector<4x32x8xbf16>
    "tpu.trace_start"() <{level = 10 : i32, message = "htc,hcd->htd"}> : () -> ()
    %cst_17 = arith.constant dense<0.000000e+00> : vector<4x8x8xf32>
    %35 = tpu.matmul %31, %34, %cst_17 {dimension_numbers = #tpu.dot_dimension_numbers<[2], [1], [1], [2], [0, 0, 0, 1, 1, 2], [0], [0]>} : vector<4x8x32xbf16>, vector<4x32x8xbf16>, vector<4x8x8xf32> -> vector<4x8x8xf32>
    "tpu.trace_stop"() : () -> ()
    %c0_18 = arith.constant 0 : index
    %c0_19 = arith.constant 0 : index
    %c0_20 = arith.constant 0 : index
    %36 = vector.load %arg6[%c0_18, %c0_19, %c0_20] : memref<4x32x8xbf16, #tpu.memory_space<vmem>>, vector<4x32x8xbf16>
    "tpu.trace_start"() <{level = 10 : i32, message = "htc,hcd->htd"}> : () -> ()
    %cst_21 = arith.constant dense<0.000000e+00> : vector<4x8x8xf32>
    %37 = tpu.matmul %31, %36, %cst_21 {dimension_numbers = #tpu.dot_dimension_numbers<[2], [1], [1], [2], [0, 0, 0, 1, 1, 2], [0], [0]>} : vector<4x8x32xbf16>, vector<4x32x8xbf16>, vector<4x8x8xf32> -> vector<4x8x8xf32>
    "tpu.trace_stop"() : () -> ()
    %38 = arith.truncf %33 : vector<4x8x8xf32> to vector<4x8x8xbf16>
    %39 = arith.truncf %35 : vector<4x8x8xf32> to vector<4x8x8xbf16>
    "tpu.trace_start"() <{level = 10 : i32, message = "hqd,hkd->hqk"}> : () -> ()
    %cst_22 = arith.constant dense<0.000000e+00> : vector<4x8x8xf32>
    %40 = tpu.matmul %38, %39, %cst_22 {dimension_numbers = #tpu.dot_dimension_numbers<[2], [2], [1], [1], [0, 0, 0, 1, 1, 1], [0], [0]>} : vector<4x8x8xbf16>, vector<4x8x8xbf16>, vector<4x8x8xf32> -> vector<4x8x8xf32>
    "tpu.trace_stop"() : () -> ()
    %cst_23 = arith.constant 0.176776692 : f32
    %41 = vector.broadcast %cst_23 : f32 to vector<4x8x8xf32>
    %42 = arith.mulf %40, %41 : vector<4x8x8xf32>
    %43 = tpu.iota {dimensions = array<i32: 1>} : vector<4x8x8xi32>
    %44 = tpu.iota {dimensions = array<i32: 2>} : vector<4x8x8xi32>
    %45 = arith.cmpi sle, %44, %43 : vector<4x8x8xi32>
    %cst_24 = arith.constant 0xFF800000 : f32
    %46 = vector.broadcast %cst_24 : f32 to vector<4x8x8xf32>
    %47 = arith.select %45, %42, %46 : vector<4x8x8xi1>, vector<4x8x8xf32>
    %cst_25 = arith.constant dense<0xFF800000> : vector<4x8xf32>
    %48 = vector.multi_reduction <maximumf>, %47, %cst_25 [2] : vector<4x8x8xf32> to vector<4x8xf32>
    %49 = vector.shape_cast %48 : vector<4x8xf32> to vector<4x8x1xf32>
    %50 = vector.broadcast %49 : vector<4x8x1xf32> to vector<4x8x8xf32>
    %51 = arith.subf %47, %50 : vector<4x8x8xf32>
    %52 = math.exp %51 : vector<4x8x8xf32>
    %cst_26 = arith.constant dense<0.000000e+00> : vector<4x8xf32>
    %53 = vector.multi_reduction <add>, %52, %cst_26 [2] : vector<4x8x8xf32> to vector<4x8xf32>
    %54 = vector.shape_cast %53 : vector<4x8xf32> to vector<4x8x1xf32>
    %55 = tpu.reciprocal %54 {approx = true} : vector<4x8x1xf32> -> vector<4x8x1xf32>
    %56 = vector.broadcast %55 : vector<4x8x1xf32> to vector<4x8x8xf32>
    %57 = arith.mulf %52, %56 : vector<4x8x8xf32>
    %58 = arith.truncf %57 : vector<4x8x8xf32> to vector<4x8x8xbf16>
    %59 = arith.truncf %37 : vector<4x8x8xf32> to vector<4x8x8xbf16>
    "tpu.trace_start"() <{level = 10 : i32, message = "hqk,hkd->hqd"}> : () -> ()
    %cst_27 = arith.constant dense<0.000000e+00> : vector<4x8x8xf32>
    %60 = tpu.matmul %58, %59, %cst_27 {dimension_numbers = #tpu.dot_dimension_numbers<[2], [1], [1], [2], [0, 0, 0, 1, 1, 2], [0], [0]>} : vector<4x8x8xbf16>, vector<4x8x8xbf16>, vector<4x8x8xf32> -> vector<4x8x8xf32>
    "tpu.trace_stop"() : () -> ()
    %61 = arith.truncf %60 : vector<4x8x8xf32> to vector<4x8x8xbf16>
    %c0_28 = arith.constant 0 : index
    %c0_29 = arith.constant 0 : index
    %c0_30 = arith.constant 0 : index
    %62 = vector.load %arg7[%c0_28, %c0_29, %c0_30] : memref<4x8x32xbf16, #tpu.memory_space<vmem>>, vector<4x8x32xbf16>
    "tpu.trace_start"() <{level = 10 : i32, message = "htd,hdc->htc"}> : () -> ()
    %cst_31 = arith.constant dense<0.000000e+00> : vector<4x8x32xf32>
    %63 = tpu.matmul %61, %62, %cst_31 {dimension_numbers = #tpu.dot_dimension_numbers<[2], [1], [1], [2], [0, 0, 0, 1, 1, 2], [0], [0]>} : vector<4x8x8xbf16>, vector<4x8x32xbf16>, vector<4x8x32xf32> -> vector<4x8x32xf32>
    "tpu.trace_stop"() : () -> ()
    %cst_32 = arith.constant dense<0.000000e+00> : vector<8x32xf32>
    %64 = vector.multi_reduction <add>, %63, %cst_32 [0] : vector<4x8x32xf32> to vector<8x32xf32>
    %c0_33 = arith.constant 0 : index
    %c0_34 = arith.constant 0 : index
    %65 = vector.load %arg8[%c0_33, %c0_34] : memref<1x32xf32, #tpu.memory_space<vmem>>, vector<1x32xf32>
    %66 = vector.broadcast %65 : vector<1x32xf32> to vector<8x32xf32>
    %67 = arith.addf %64, %66 : vector<8x32xf32>
    %68 = arith.addf %1, %67 : vector<8x32xf32>
    %cst_35 = arith.constant dense<0.000000e+00> : vector<8xf32>
    %69 = vector.multi_reduction <add>, %68, %cst_35 [1] : vector<8x32xf32> to vector<8xf32>
    %70 = vector.shape_cast %69 : vector<8xf32> to vector<8x1xf32>
    %cst_36 = arith.constant 3.200000e+01 : f32
    %71 = vector.broadcast %cst_36 : f32 to vector<8x1xf32>
    %72 = arith.divf %70, %71 : vector<8x1xf32>
    %73 = vector.broadcast %72 : vector<8x1xf32> to vector<8x32xf32>
    %74 = arith.subf %68, %73 : vector<8x32xf32>
    %75 = vector.broadcast %72 : vector<8x1xf32> to vector<8x32xf32>
    %76 = arith.subf %68, %75 : vector<8x32xf32>
    %77 = arith.mulf %74, %76 : vector<8x32xf32>
    %cst_37 = arith.constant dense<0.000000e+00> : vector<8xf32>
    %78 = vector.multi_reduction <add>, %77, %cst_37 [1] : vector<8x32xf32> to vector<8xf32>
    %79 = vector.shape_cast %78 : vector<8xf32> to vector<8x1xf32>
    %cst_38 = arith.constant 3.200000e+01 : f32
    %80 = vector.broadcast %cst_38 : f32 to vector<8x1xf32>
    %81 = arith.divf %79, %80 : vector<8x1xf32>
    %82 = vector.broadcast %72 : vector<8x1xf32> to vector<8x32xf32>
    %83 = arith.subf %68, %82 : vector<8x32xf32>
    %cst_39 = arith.constant 9.99999974E-6 : f32
    %84 = vector.broadcast %cst_39 : f32 to vector<8x1xf32>
    %85 = arith.addf %81, %84 : vector<8x1xf32>
    %86 = math.rsqrt %85 : vector<8x1xf32>
    %87 = vector.broadcast %86 : vector<8x1xf32> to vector<8x32xf32>
    %88 = arith.mulf %83, %87 : vector<8x32xf32>
    %c0_40 = arith.constant 0 : index
    %c0_41 = arith.constant 0 : index
    %89 = vector.load %arg9[%c0_40, %c0_41] : memref<1x32xf32, #tpu.memory_space<vmem>>, vector<1x32xf32>
    %90 = vector.broadcast %89 : vector<1x32xf32> to vector<8x32xf32>
    %91 = arith.mulf %88, %90 : vector<8x32xf32>
    %c0_42 = arith.constant 0 : index
    %c0_43 = arith.constant 0 : index
    %92 = vector.load %arg10[%c0_42, %c0_43] : memref<1x32xf32, #tpu.memory_space<vmem>>, vector<1x32xf32>
    %93 = vector.broadcast %92 : vector<1x32xf32> to vector<8x32xf32>
    %94 = arith.addf %91, %93 : vector<8x32xf32>
    %95 = arith.truncf %94 : vector<8x32xf32> to vector<8x32xbf16>
    %c0_44 = arith.constant 0 : index
    %c0_45 = arith.constant 0 : index
    %96 = vector.load %arg11[%c0_44, %c0_45] : memref<32x128xbf16, #tpu.memory_space<vmem>>, vector<32x128xbf16>
    %cst_46 = arith.constant dense<0.000000e+00> : vector<8x128xf32>
    %97 = tpu.matmul %95, %96, %cst_46 {dimension_numbers = #tpu.dot_dimension_numbers<[1], [0], [0], [1], [0, 0, 1, 1], [], []>} : vector<8x32xbf16>, vector<32x128xbf16>, vector<8x128xf32> -> vector<8x128xf32>
    %c0_47 = arith.constant 0 : index
    %c0_48 = arith.constant 0 : index
    %98 = vector.load %arg12[%c0_47, %c0_48] : memref<1x128xf32, #tpu.memory_space<vmem>>, vector<1x128xf32>
    %99 = vector.broadcast %98 : vector<1x128xf32> to vector<8x128xf32>
    %100 = arith.addf %97, %99 : vector<8x128xf32>
    %cst_49 = arith.constant 0.000000e+00 : f32
    %101 = vector.broadcast %cst_49 : f32 to vector<8x128xf32>
    %102 = arith.maximumf %100, %101 : vector<8x128xf32>
    %103 = arith.truncf %102 : vector<8x128xf32> to vector<8x128xbf16>
    %c0_50 = arith.constant 0 : index
    %c0_51 = arith.constant 0 : index
    %104 = vector.load %arg13[%c0_50, %c0_51] : memref<128x32xbf16, #tpu.memory_space<vmem>>, vector<128x32xbf16>
    %cst_52 = arith.constant dense<0.000000e+00> : vector<8x32xf32>
    %105 = tpu.matmul %103, %104, %cst_52 {dimension_numbers = #tpu.dot_dimension_numbers<[1], [0], [0], [1], [0, 0, 1, 1], [], []>} : vector<8x128xbf16>, vector<128x32xbf16>, vector<8x32xf32> -> vector<8x32xf32>
    %c0_53 = arith.constant 0 : index
    %c0_54 = arith.constant 0 : index
    %106 = vector.load %arg14[%c0_53, %c0_54] : memref<1x32xf32, #tpu.memory_space<vmem>>, vector<1x32xf32>
    %107 = vector.broadcast %106 : vector<1x32xf32> to vector<8x32xf32>
    %108 = arith.addf %105, %107 : vector<8x32xf32>
    %109 = arith.addf %68, %108 : vector<8x32xf32>
    %c0_55 = arith.constant 0 : index
    %c0_56 = arith.constant 0 : index
    %c0_57 = arith.constant 0 : index
    %110 = vector.load %arg15[%c0_55, %c0_56, %c0_57] : memref<1x8x32xf32, #tpu.memory_space<vmem>>, vector<1x8x32xf32>
    %111 = vector.shape_cast %110 : vector<1x8x32xf32> to vector<8x32xf32>
    %112 = vector.shape_cast %109 : vector<8x32xf32> to vector<1x8x32xf32>
    tpu.vector_store %arg15[%c0_55, %c0_56, %c0_57], %112 {strides = array<i32>} : memref<1x8x32xf32, #tpu.memory_space<vmem>>, vector<1x8x32xf32>,
    return
  }
  func.func @transform_0(%arg0: i32) -> (i32, i32, i32) {
    %c0_i32 = arith.constant 0 : i32
    %c0_i32_0 = arith.constant 0 : i32
    %c0_i32_1 = arith.constant 0 : i32
    return %arg0, %c0_i32, %c0_i32_0 : i32, i32, i32
  }
  func.func @transform_1(%arg0: i32) -> (i32, i32) {
    %c0_i32 = arith.constant 0 : i32
    %c0_i32_0 = arith.constant 0 : i32
    %c0_i32_1 = arith.constant 0 : i32
    return %c0_i32, %c0_i32_0 : i32, i32
  }
  func.func @transform_2(%arg0: i32) -> (i32, i32) {
    %c0_i32 = arith.constant 0 : i32
    %c0_i32_0 = arith.constant 0 : i32
    %c0_i32_1 = arith.constant 0 : i32
    return %c0_i32, %c0_i32_0 : i32, i32
  }
  func.func @transform_3(%arg0: i32) -> (i32, i32, i32) {
    %c0_i32 = arith.constant 0 : i32
    %c0_i32_0 = arith.constant 0 : i32
    %c0_i32_1 = arith.constant 0 : i32
    %c0_i32_2 = arith.constant 0 : i32
    return %c0_i32, %c0_i32_0, %c0_i32_1 : i32, i32, i32
  }
  func.func @transform_4(%arg0: i32) -> (i32, i32, i32) {
    %c0_i32 = arith.constant 0 : i32
    %c0_i32_0 = arith.constant 0 : i32
    %c0_i32_1 = arith.constant 0 : i32
    %c0_i32_2 = arith.constant 0 : i32
    return %c0_i32, %c0_i32_0, %c0_i32_1 : i32, i32, i32
  }
  func.func @transform_5(%arg0: i32) -> (i32, i32, i32) {
    %c0_i32 = arith.constant 0 : i32
    %c0_i32_0 = arith.constant 0 : i32
    %c0_i32_1 = arith.constant 0 : i32
    %c0_i32_2 = arith.constant 0 : i32
    return %c0_i32, %c0_i32_0, %c0_i32_1 : i32, i32, i32
  }
  func.func @transform_6(%arg0: i32) -> (i32, i32, i32) {
    %c0_i32 = arith.constant 0 : i32
    %c0_i32_0 = arith.constant 0 : i32
    %c0_i32_1 = arith.constant 0 : i32
    %c0_i32_2 = arith.constant 0 : i32
    return %c0_i32, %c0_i32_0, %c0_i32_1 : i32, i32, i32
  }
  func.func @transform_7(%arg0: i32) -> (i32, i32) {
    %c0_i32 = arith.constant 0 : i32
    %c0_i32_0 = arith.constant 0 : i32
    %c0_i32_1 = arith.constant 0 : i32
    return %c0_i32, %c0_i32_0 : i32, i32
  }
  func.func @transform_8(%arg0: i32) -> (i32, i32) {
    %c0_i32 = arith.constant 0 : i32
    %c0_i32_0 = arith.constant 0 : i32
    %c0_i32_1 = arith.constant 0 : i32
    return %c0_i32, %c0_i32_0 : i32, i32
  }
  func.func @transform_9(%arg0: i32) -> (i32, i32) {
    %c0_i32 = arith.constant 0 : i32
    %c0_i32_0 = arith.constant 0 : i32
    %c0_i32_1 = arith.constant 0 : i32
    return %c0_i32, %c0_i32_0 : i32, i32
  }
  func.func @transform_10(%arg0: i32) -> (i32, i32) {
    %c0_i32 = arith.constant 0 : i32
    %c0_i32_0 = arith.constant 0 : i32
    %c0_i32_1 = arith.constant 0 : i32
    return %c0_i32, %c0_i32_0 : i32, i32
  }
  func.func @transform_11(%arg0: i32) -> (i32, i32) {
    %c0_i32 = arith.constant 0 : i32
    %c0_i32_0 = arith.constant 0 : i32
    %c0_i32_1 = arith.constant 0 : i32
    return %c0_i32, %c0_i32_0 : i32, i32
  }
  func.func @transform_12(%arg0: i32) -> (i32, i32) {
    %c0_i32 = arith.constant 0 : i32
    %c0_i32_0 = arith.constant 0 : i32
    %c0_i32_1 = arith.constant 0 : i32
    return %c0_i32, %c0_i32_0 : i32, i32
  }
  func.func @transform_13(%arg0: i32) -> (i32, i32) {
    %c0_i32 = arith.constant 0 : i32
    %c0_i32_0 = arith.constant 0 : i32
    %c0_i32_1 = arith.constant 0 : i32
    return %c0_i32, %c0_i32_0 : i32, i32
  }
  func.func @transform_14(%arg0: i32) -> (i32, i32, i32) {
    %c0_i32 = arith.constant 0 : i32
    %c0_i32_0 = arith.constant 0 : i32
    %c0_i32_1 = arith.constant 0 : i32
    return %arg0, %c0_i32, %c0_i32_0 : i32, i32, i32
  }
}

</mosaic_0001>

<llo_original>
// kernel: tpu_custom_call.1
$region0: #{tpu_custom_call.1}
  #allocation0 [shape = 'u32[]', space=smem, size = 0x4, offset = 0x4, fixed_abs, tag = 'smem constant byte address 0x4 - core index']
  #allocation1 [shape = 'u32[144,128]{1,0:T(1,128)}', space=vmem, size = 0x12000, scoped, tag = 'internal scratch']
  %s0 = inlined_call_operand.hbm [shape: f32[2,8,32], index: 0, kind: input, shape index: {}]
  %s1 = inlined_call_operand.hbm [shape: f32[1,32], index: 1, kind: input, shape index: {}]
  %s2 = inlined_call_operand.hbm [shape: f32[1,32], index: 2, kind: input, shape index: {}]
  %s3 = inlined_call_operand.hbm [shape: bf16[4,32,8], index: 3, kind: input, shape index: {}]
  %s4 = inlined_call_operand.hbm [shape: bf16[4,32,8], index: 4, kind: input, shape index: {}]
  %s5 = inlined_call_operand.hbm [shape: bf16[4,32,8], index: 5, kind: input, shape index: {}]
  %s6 = inlined_call_operand.hbm [shape: bf16[4,8,32], index: 6, kind: input, shape index: {}]
  %s7 = inlined_call_operand.hbm [shape: f32[1,32], index: 7, kind: input, shape index: {}]
  %s8 = inlined_call_operand.hbm [shape: f32[1,32], index: 8, kind: input, shape index: {}]
  %s9 = inlined_call_operand.hbm [shape: f32[1,32], index: 9, kind: input, shape index: {}]
  %s10 = inlined_call_operand.hbm [shape: bf16[32,128], index: 10, kind: input, shape index: {}]
  %s11 = inlined_call_operand.hbm [shape: f32[1,128], index: 11, kind: input, shape index: {}]
  %s12 = inlined_call_operand.hbm [shape: bf16[128,32], index: 12, kind: input, shape index: {}]
  %s13 = inlined_call_operand.hbm [shape: f32[1,32], index: 13, kind: input, shape index: {}]
  %s14 = inlined_call_operand.hbm [shape: f32[2,8,32], index: 14, kind: output, shape index: {}]
  %s15 = sld [smem:[#allocation0]]
  $region145: #{tpu_custom_call.1} parent=0
    _
  %s17 = ssub.s32 1, %s15
  %s18 = scalar_select 0, %s17, %s15
  $region1: #{tpu_custom_call.1} parent=0
    #allocation2 [shape = 'u8[8192]{0}', space=vmem, size = 0x2000, scoped, tag = 'input window, operand 0']
    #allocation3 [shape = 's32[2]{0}', space=sflag, size = 0x8, scoped, tag = 'scoped memory for tpu_custom_call.1']
    #allocation4 [shape = 's32[2]{0}', space=sflag, size = 0x8, scoped, tag = 'scoped memory for tpu_custom_call.1']
    #allocation5 [shape = 'u8[512]{0}', space=vmem, size = 0x400, scoped, tag = 'input window, operand 1, single buffered']
    #allocation6 [shape = 's32[1]{0}', space=sflag, size = 0x4, scoped, tag = 'scoped memory for tpu_custom_call.1']
    #allocation7 [shape = 'u8[512]{0}', space=vmem, size = 0x400, scoped, tag = 'input window, operand 2, single buffered']
    #allocation8 [shape = 'u8[32768]{0}', space=vmem, size = 0x8000, scoped, tag = 'input window, operand 3, single buffered']
    #allocation9 [shape = 's32[1]{0}', space=sflag, size = 0x4, scoped, tag = 'scoped memory for tpu_custom_call.1']
    #allocation10 [shape = 'u8[32768]{0}', space=vmem, size = 0x8000, scoped, tag = 'input window, operand 4, single buffered']
    #allocation11 [shape = 'u8[32768]{0}', space=vmem, size = 0x8000, scoped, tag = 'input window, operand 5, single buffered']
    #allocation12 [shape = 's32[1]{0}', space=sflag, size = 0x4, scoped, tag = 'scoped memory for tpu_custom_call.1']
    #allocation13 [shape = 'u8[8192]{0}', space=vmem, size = 0x2000, scoped, tag = 'input window, operand 6, single buffered']
    #allocation14 [shape = 'u8[512]{0}', space=vmem, size = 0x400, scoped, tag = 'input window, operand 7, single buffered']
    #allocation15 [shape = 's32[1]{0}', space=sflag, size = 0x4, scoped, tag = 'scoped memory for tpu_custom_call.1']
    #allocation16 [shape = 'u8[512]{0}', space=vmem, size = 0x400, scoped, tag = 'input window, operand 8, single buffered']
    #allocation17 [shape = 'u8[512]{0}', space=vmem, size = 0x400, scoped, tag = 'input window, operand 9, single buffered']
    #allocation18 [shape = 's32[1]{0}', space=sflag, size = 0x4, scoped, tag = 'scoped memory for tpu_custom_call.1']
    #allocation19 [shape = 'u8[8192]{0}', space=vmem, size = 0x2000, scoped, tag = 'input window, operand 10, single buffered']
    #allocation20 [shape = 'u8[512]{0}', space=vmem, size = 0x400, scoped, tag = 'input window, operand 11, single buffered']
    #allocation21 [shape = 's32[1]{0}', space=sflag, size = 0x4, scoped, tag = 'scoped memory for tpu_custom_call.1']
    #allocation22 [shape = 'u8[32768]{0}', space=vmem, size = 0x8000, scoped, tag = 'input window, operand 12, single buffered']
    #allocation23 [shape = 'u8[512]{0}', space=vmem, size = 0x400, scoped, tag = 'input window, operand 13, single buffered']
    #allocation24 [shape = 's32[1]{0}', space=sflag, size = 0x4, scoped, tag = 'scoped memory for tpu_custom_call.1']
    #allocation25 [shape = 'u8[8192]{0}', space=vmem, size = 0x2000, scoped, tag = 'output window, operand 0']
    %19 = vsyncpa [#allocation3], 0
    %s20 = scalar_lea.sflag [#allocation3], 1
    %21 = vsyncpa %s20, 0
    %22 = vsyncpa [#allocation6], 0
    %23 = vsyncpa [#allocation9], 0
    %24 = vsyncpa [#allocation12], 0
    %25 = vsyncpa [#allocation15], 0
    %26 = vsyncpa [#allocation18], 0
    %27 = vsyncpa [#allocation21], 0
    %28 = vsyncpa [#allocation24], 0
    %29 = vsyncpa [#allocation4], 0
    %s30 = scalar_lea.sflag [#allocation4], 1
    %31 = vsyncpa %s30, 0
    loop: start=0, step=1, limit=4
    $region2: #{tpu_custom_call.1} parent=1 // loop_pre_header
      _
    $region3: #{tpu_custom_call.1} parent=1 // loop_header
      %s33 = sphi 0, %s37
      %p34 = scmp.ge.s32.totalorder %s33, 4
      %s43 = sphi 0, %s45
      %s46 = sphi 0, %s43
      %s47 = sphi 0, %s46
      %s63 = sphi 0, %s47
      %s67 = sphi 0, %s67
      %s69 = sphi 0, %s67
      %s70 = sphi 0, %s69
      %s84 = sphi 0, %s70
      %s88 = sphi 0, %s88
      %s90 = sphi 0, %s88
      %s91 = sphi 0, %s90
      %s105 = sphi 0, %s91
      %s109 = sphi 0, %s109
      %s111 = sphi 0, %s109
      %s112 = sphi 0, %s111
      %s126 = sphi 0, %s112
      %s130 = sphi 0, %s130
      %s132 = sphi 0, %s130
      %s133 = sphi 0, %s132
      %s147 = sphi 0, %s133
      %s151 = sphi 0, %s151
      %s153 = sphi 0, %s151
      %s154 = sphi 0, %s153
      %s168 = sphi 0, %s154
      %s172 = sphi 0, %s172
      %s174 = sphi 0, %s172
      %s175 = sphi 0, %s174
      %s189 = sphi 0, %s175
      %s193 = sphi 0, %s193
      %s195 = sphi 0, %s193
      %s196 = sphi 0, %s195
      %s210 = sphi 0, %s196
      %s214 = sphi 0, %s214
      %s216 = sphi 0, %s214
      %s217 = sphi 0, %s216
      %s231 = sphi 0, %s217
      %s235 = sphi 0, %s235
      %s237 = sphi 0, %s235
      %s238 = sphi 0, %s237
      %s252 = sphi 0, %s238
      %s256 = sphi 0, %s256
      %s258 = sphi 0, %s256
      %s259 = sphi 0, %s258
      %s273 = sphi 0, %s259
      %s277 = sphi 0, %s277
      %s279 = sphi 0, %s277
      %s280 = sphi 0, %s279
      %s294 = sphi 0, %s280
      %s298 = sphi 0, %s298
      %s300 = sphi 0, %s298
      %s301 = sphi 0, %s300
      %s315 = sphi 0, %s301
      %s319 = sphi 0, %s319
      %s321 = sphi 0, %s319
      %s322 = sphi 0, %s321
      %s336 = sphi 0, %s322
      %s342 = sphi 0, %s344
      %s345 = sphi 0, %s342
      %s346 = sphi 0, %s345
      %s362 = sphi 0, %s346
    $region4: #{tpu_custom_call.1} parent=1 // loop_header_branch
      %36 = sbr.rel (%p34) target = $region8
    $region5: #{tpu_custom_call.1} parent=1 // loop_body
      %s38 = ssub.s32 %s33, 1
      %s39 = ssub.s32 %s33, 2
      %s40 = sadd.s32 %s33, 1
      %s41 = ssub.s32 %s33, %s40
      %p42 = scmp.eq.s32.totalorder %s41, 0
      %s44 = sadd.s32 %s43, 1
      %s45 = scalar_select %p42, %s43, %s44
      %p48 = pneg %p42
      %p49 = scmp.eq.s32.totalorder %s33, 1
      %p50 = por %p48, %p49
      %p51 = scmp.ne.s32.totalorder %s43, %s46
      %p52 = scmp.eq.s32.totalorder %s33, 0
      %p53 = por %p51, %p52
      %p54 = scmp.ne.s32.totalorder %s43, %s46
      %p55 = scmp.eq.s32.totalorder %s38, 1
      %p56 = por %p54, %p55
      %p57 = scmp.ne.s32.totalorder %s46, %s47
      %p58 = scmp.eq.s32.totalorder %s38, 0
      %p59 = por %p57, %p58
      %p60 = scmp.ne.s32.totalorder %s46, %s47
      %p61 = scmp.eq.s32.totalorder %s39, 1
      %p62 = por %p60, %p61
      %p64 = scmp.ne.s32.totalorder %s47, %s63
      %p65 = scmp.eq.s32.totalorder %s39, 0
      %p66 = por %p64, %p65
      %s68 = sadd.s32 %s67, 1
      %p71 = scmp.eq.s32.totalorder %s33, 1
      %p72 = scmp.ne.s32.totalorder %s67, %s69
      %p73 = scmp.eq.s32.totalorder %s33, 0
      %p74 = por %p72, %p73
      %p75 = scmp.ne.s32.totalorder %s67, %s69
      %p76 = scmp.eq.s32.totalorder %s38, 1
      %p77 = por %p75, %p76
      %p78 = scmp.ne.s32.totalorder %s69, %s70
      %p79 = scmp.eq.s32.totalorder %s38, 0
      %p80 = por %p78, %p79
      %p81 = scmp.ne.s32.totalorder %s69, %s70
      %p82 = scmp.eq.s32.totalorder %s39, 1
      %p83 = por %p81, %p82
      %p85 = scmp.ne.s32.totalorder %s70, %s84
      %p86 = scmp.eq.s32.totalorder %s39, 0
      %p87 = por %p85, %p86
      %s89 = sadd.s32 %s88, 1
      %p92 = scmp.eq.s32.totalorder %s33, 1
      %p93 = scmp.ne.s32.totalorder %s88, %s90
      %p94 = scmp.eq.s32.totalorder %s33, 0
      %p95 = por %p93, %p94
      %p96 = scmp.ne.s32.totalorder %s88, %s90
      %p97 = scmp.eq.s32.totalorder %s38, 1
      %p98 = por %p96, %p97
      %p99 = scmp.ne.s32.totalorder %s90, %s91
      %p100 = scmp.eq.s32.totalorder %s38, 0
      %p101 = por %p99, %p100
      %p102 = scmp.ne.s32.totalorder %s90, %s91
      %p103 = scmp.eq.s32.totalorder %s39, 1
      %p104 = por %p102, %p103
      %p106 = scmp.ne.s32.totalorder %s91, %s105
      %p107 = scmp.eq.s32.totalorder %s39, 0
      %p108 = por %p106, %p107
      %s110 = sadd.s32 %s109, 1
      %p113 = scmp.eq.s32.totalorder %s33, 1
      %p114 = scmp.ne.s32.totalorder %s109, %s111
      %p115 = scmp.eq.s32.totalorder %s33, 0
      %p116 = por %p114, %p115
      %p117 = scmp.ne.s32.totalorder %s109, %s111
      %p118 = scmp.eq.s32.totalorder %s38, 1
      %p119 = por %p117, %p118
      %p120 = scmp.ne.s32.totalorder %s111, %s112
      %p121 = scmp.eq.s32.totalorder %s38, 0
      %p122 = por %p120, %p121
      %p123 = scmp.ne.s32.totalorder %s111, %s112
      %p124 = scmp.eq.s32.totalorder %s39, 1
      %p125 = por %p123, %p124
      %p127 = scmp.ne.s32.totalorder %s112, %s126
      %p128 = scmp.eq.s32.totalorder %s39, 0
      %p129 = por %p127, %p128
      %s131 = sadd.s32 %s130, 1
      %p134 = scmp.eq.s32.totalorder %s33, 1
      %p135 = scmp.ne.s32.totalorder %s130, %s132
      %p136 = scmp.eq.s32.totalorder %s33, 0
      %p137 = por %p135, %p136
      %p138 = scmp.ne.s32.totalorder %s130, %s132
      %p139 = scmp.eq.s32.totalorder %s38, 1
      %p140 = por %p138, %p139
      %p141 = scmp.ne.s32.totalorder %s132, %s133
      %p142 = scmp.eq.s32.totalorder %s38, 0
      %p143 = por %p141, %p142
      %p144 = scmp.ne.s32.totalorder %s132, %s133
      %p145 = scmp.eq.s32.totalorder %s39, 1
      %p146 = por %p144, %p145
      %p148 = scmp.ne.s32.totalorder %s133, %s147
      %p149 = scmp.eq.s32.totalorder %s39, 0
      %p150 = por %p148, %p149
      %s152 = sadd.s32 %s151, 1
      %p155 = scmp.eq.s32.totalorder %s33, 1
      %p156 = scmp.ne.s32.totalorder %s151, %s153
      %p157 = scmp.eq.s32.totalorder %s33, 0
      %p158 = por %p156, %p157
      %p159 = scmp.ne.s32.totalorder %s151, %s153
      %p160 = scmp.eq.s32.totalorder %s38, 1
      %p161 = por %p159, %p160
      %p162 = scmp.ne.s32.totalorder %s153, %s154
      %p163 = scmp.eq.s32.totalorder %s38, 0
      %p164 = por %p162, %p163
      %p165 = scmp.ne.s32.totalorder %s153, %s154
      %p166 = scmp.eq.s32.totalorder %s39, 1
      %p167 = por %p165, %p166
      %p169 = scmp.ne.s32.totalorder %s154, %s168
      %p170 = scmp.eq.s32.totalorder %s39, 0
      %p171 = por %p169, %p170
      %s173 = sadd.s32 %s172, 1
      %p176 = scmp.eq.s32.totalorder %s33, 1
      %p177 = scmp.ne.s32.totalorder %s172, %s174
      %p178 = scmp.eq.s32.totalorder %s33, 0
      %p179 = por %p177, %p178
      %p180 = scmp.ne.s32.totalorder %s172, %s174
      %p181 = scmp.eq.s32.totalorder %s38, 1
      %p182 = por %p180, %p181
      %p183 = scmp.ne.s32.totalorder %s174, %s175
      %p184 = scmp.eq.s32.totalorder %s38, 0
      %p185 = por %p183, %p184
      %p186 = scmp.ne.s32.totalorder %s174, %s175
      %p187 = scmp.eq.s32.totalorder %s39, 1
      %p188 = por %p186, %p187
      %p190 = scmp.ne.s32.totalorder %s175, %s189
      %p191 = scmp.eq.s32.totalorder %s39, 0
      %p192 = por %p190, %p191
      %s194 = sadd.s32 %s193, 1
      %p197 = scmp.eq.s32.totalorder %s33, 1
      %p198 = scmp.ne.s32.totalorder %s193, %s195
      %p199 = scmp.eq.s32.totalorder %s33, 0
      %p200 = por %p198, %p199
      %p201 = scmp.ne.s32.totalorder %s193, %s195
      %p202 = scmp.eq.s32.totalorder %s38, 1
      %p203 = por %p201, %p202
      %p204 = scmp.ne.s32.totalorder %s195, %s196
      %p205 = scmp.eq.s32.totalorder %s38, 0
      %p206 = por %p204, %p205
      %p207 = scmp.ne.s32.totalorder %s195, %s196
      %p208 = scmp.eq.s32.totalorder %s39, 1
      %p209 = por %p207, %p208
      %p211 = scmp.ne.s32.totalorder %s196, %s210
      %p212 = scmp.eq.s32.totalorder %s39, 0
      %p213 = por %p211, %p212
      %s215 = sadd.s32 %s214, 1
      %p218 = scmp.eq.s32.totalorder %s33, 1
      %p219 = scmp.ne.s32.totalorder %s214, %s216
      %p220 = scmp.eq.s32.totalorder %s33, 0
      %p221 = por %p219, %p220
      %p222 = scmp.ne.s32.totalorder %s214, %s216
      %p223 = scmp.eq.s32.totalorder %s38, 1
      %p224 = por %p222, %p223
      %p225 = scmp.ne.s32.totalorder %s216, %s217
      %p226 = scmp.eq.s32.totalorder %s38, 0
      %p227 = por %p225, %p226
      %p228 = scmp.ne.s32.totalorder %s216, %s217
      %p229 = scmp.eq.s32.totalorder %s39, 1
      %p230 = por %p228, %p229
      %p232 = scmp.ne.s32.totalorder %s217, %s231
      %p233 = scmp.eq.s32.totalorder %s39, 0
      %p234 = por %p232, %p233
      %s236 = sadd.s32 %s235, 1
      %p239 = scmp.eq.s32.totalorder %s33, 1
      %p240 = scmp.ne.s32.totalorder %s235, %s237
      %p241 = scmp.eq.s32.totalorder %s33, 0
      %p242 = por %p240, %p241
      %p243 = scmp.ne.s32.totalorder %s235, %s237
      %p244 = scmp.eq.s32.totalorder %s38, 1
      %p245 = por %p243, %p244
      %p246 = scmp.ne.s32.totalorder %s237, %s238
      %p247 = scmp.eq.s32.totalorder %s38, 0
      %p248 = por %p246, %p247
      %p249 = scmp.ne.s32.totalorder %s237, %s238
      %p250 = scmp.eq.s32.totalorder %s39, 1
      %p251 = por %p249, %p250
      %p253 = scmp.ne.s32.totalorder %s238, %s252
      %p254 = scmp.eq.s32.totalorder %s39, 0
      %p255 = por %p253, %p254
      %s257 = sadd.s32 %s256, 1
      %p260 = scmp.eq.s32.totalorder %s33, 1
      %p261 = scmp.ne.s32.totalorder %s256, %s258
      %p262 = scmp.eq.s32.totalorder %s33, 0
      %p263 = por %p261, %p262
      %p264 = scmp.ne.s32.totalorder %s256, %s258
      %p265 = scmp.eq.s32.totalorder %s38, 1
      %p266 = por %p264, %p265
      %p267 = scmp.ne.s32.totalorder %s258, %s259
      %p268 = scmp.eq.s32.totalorder %s38, 0
      %p269 = por %p267, %p268
      %p270 = scmp.ne.s32.totalorder %s258, %s259
      %p271 = scmp.eq.s32.totalorder %s39, 1
      %p272 = por %p270, %p271
      %p274 = scmp.ne.s32.totalorder %s259, %s273
      %p275 = scmp.eq.s32.totalorder %s39, 0
      %p276 = por %p274, %p275
      %s278 = sadd.s32 %s277, 1
      %p281 = scmp.eq.s32.totalorder %s33, 1
      %p282 = scmp.ne.s32.totalorder %s277, %s279
      %p283 = scmp.eq.s32.totalorder %s33, 0
      %p284 = por %p282, %p283
      %p285 = scmp.ne.s32.totalorder %s277, %s279
      %p286 = scmp.eq.s32.totalorder %s38, 1
      %p287 = por %p285, %p286
      %p288 = scmp.ne.s32.totalorder %s279, %s280
      %p289 = scmp.eq.s32.totalorder %s38, 0
      %p290 = por %p288, %p289
      %p291 = scmp.ne.s32.totalorder %s279, %s280
      %p292 = scmp.eq.s32.totalorder %s39, 1
      %p293 = por %p291, %p292
      %p295 = scmp.ne.s32.totalorder %s280, %s294
      %p296 = scmp.eq.s32.totalorder %s39, 0
      %p297 = por %p295, %p296
      %s299 = sadd.s32 %s298, 1
      %p302 = scmp.eq.s32.totalorder %s33, 1
      %p303 = scmp.ne.s32.totalorder %s298, %s300
      %p304 = scmp.eq.s32.totalorder %s33, 0
      %p305 = por %p303, %p304
      %p306 = scmp.ne.s32.totalorder %s298, %s300
      %p307 = scmp.eq.s32.totalorder %s38, 1
      %p308 = por %p306, %p307
      %p309 = scmp.ne.s32.totalorder %s300, %s301
      %p310 = scmp.eq.s32.totalorder %s38, 0
      %p311 = por %p309, %p310
      %p312 = scmp.ne.s32.totalorder %s300, %s301
      %p313 = scmp.eq.s32.totalorder %s39, 1
      %p314 = por %p312, %p313
      %p316 = scmp.ne.s32.totalorder %s301, %s315
      %p317 = scmp.eq.s32.totalorder %s39, 0
      %p318 = por %p316, %p317
      %s320 = sadd.s32 %s319, 1
      %p323 = scmp.eq.s32.totalorder %s33, 1
      %p324 = scmp.ne.s32.totalorder %s319, %s321
      %p325 = scmp.eq.s32.totalorder %s33, 0
      %p326 = por %p324, %p325
      %p327 = scmp.ne.s32.totalorder %s319, %s321
      %p328 = scmp.eq.s32.totalorder %s38, 1
      %p329 = por %p327, %p328
      %p330 = scmp.ne.s32.totalorder %s321, %s322
      %p331 = scmp.eq.s32.totalorder %s38, 0
      %p332 = por %p330, %p331
      %p333 = scmp.ne.s32.totalorder %s321, %s322
      %p334 = scmp.eq.s32.totalorder %s39, 1
      %p335 = por %p333, %p334
      %p337 = scmp.ne.s32.totalorder %s322, %s336
      %p338 = scmp.eq.s32.totalorder %s39, 0
      %p339 = por %p337, %p338
      %s340 = ssub.s32 %s33, %s40
      %p341 = scmp.eq.s32.totalorder %s340, 0
      %s343 = sadd.s32 %s342, 1
      %s344 = scalar_select %p341, %s342, %s343
      %p347 = pneg %p341
      %p348 = scmp.eq.s32.totalorder %s33, 1
      %p349 = por %p347, %p348
      %p350 = scmp.ne.s32.totalorder %s342, %s345
      %p351 = scmp.eq.s32.totalorder %s33, 0
      %p352 = por %p350, %p351
      %p353 = scmp.ne.s32.totalorder %s342, %s345
      %p354 = scmp.eq.s32.totalorder %s38, 1
      %p355 = por %p353, %p354
      %p356 = scmp.ne.s32.totalorder %s345, %s346
      %p357 = scmp.eq.s32.totalorder %s38, 0
      %p358 = por %p356, %p357
      %p359 = scmp.ne.s32.totalorder %s345, %s346
      %p360 = scmp.eq.s32.totalorder %s39, 1
      %p361 = por %p359, %p360
      %p363 = scmp.ne.s32.totalorder %s346, %s362
      %p364 = scmp.eq.s32.totalorder %s39, 0
      %p365 = por %p363, %p364
      %p366 = scmp.le.s32.totalorder 1, %s33
      %p367 = scmp.lt.s32.totalorder %s33, 3
      %p368 = pnand %p366, %p367
      %p369 = pneg %p368
      // Predicated region
      $region9: #{tpu_custom_call.1} parent=5 // pred_check
        _
      $region10: #{tpu_custom_call.1} parent=5 // pred_check_branch
        %371 = sbr.rel (%p368) target = $region12
      $region11: #{tpu_custom_call.1} parent=5 // pred_region
        %s372 = ssub.s32 %s33, 1
        // Predicated region
        $region13: #{tpu_custom_call.1} parent=11 // pred_check
          %p373 = pneg %p80
        $region14: #{tpu_custom_call.1} parent=11 // pred_check_branch
          %375 = sbr.rel (%p373) target = $region16
        $region15: #{tpu_custom_call.1} parent=11 // pred_region
          %s377 = ssub.s32 16, 16
          %378 = vsyncadd [#allocation6], %s377
          %s380 = sshll.u32 [#allocation5], 4
          %s381 = int_to_ptr.vmem [resolvable:$true] %s380
          %383 = dma.hbm_to_vmem [thread:$0]  %s1, 16, %s381, [#allocation6]
        $region16: #{tpu_custom_call.1} parent=11 // pred_fallthru
          _
        // Predicated region
        $region17: #{tpu_custom_call.1} parent=11 // pred_check
          %p384 = pneg %p101
        $region18: #{tpu_custom_call.1} parent=11 // pred_check_branch
          %386 = sbr.rel (%p384) target = $region20
        $region19: #{tpu_custom_call.1} parent=11 // pred_region
          %s388 = ssub.s32 16, 16
          %389 = vsyncadd [#allocation6], %s388
          %s391 = sshll.u32 [#allocation7], 4
          %s392 = int_to_ptr.vmem [resolvable:$true] %s391
          %394 = dma.hbm_to_vmem [thread:$0]  %s2, 16, %s392, [#allocation6]
        $region20: #{tpu_custom_call.1} parent=11 // pred_fallthru
          _
        // Predicated region
        $region21: #{tpu_custom_call.1} parent=11 // pred_check
          %p395 = pneg %p122
        $region22: #{tpu_custom_call.1} parent=11 // pred_check_branch
          %397 = sbr.rel (%p395) target = $region24
        $region23: #{tpu_custom_call.1} parent=11 // pred_region
          %s399 = ssub.s32 1024, 1024
          %400 = vsyncadd [#allocation9], %s399
          %s401 = sshll.u32 [#allocation8], 4
          %s402 = int_to_ptr.vmem [resolvable:$true] %s401
          %407 = dma.hbm_to_vmem [thread:$0]  %s3, 1024, %s402, [#allocation9], 64, 64, 4
        $region24: #{tpu_custom_call.1} parent=11 // pred_fallthru
          _
        // Predicated region
        $region25: #{tpu_custom_call.1} parent=11 // pred_check
          %p408 = pneg %p143
        $region26: #{tpu_custom_call.1} parent=11 // pred_check_branch
          %410 = sbr.rel (%p408) target = $region28
        $region27: #{tpu_custom_call.1} parent=11 // pred_region
          %s412 = ssub.s32 1024, 1024
          %413 = vsyncadd [#allocation9], %s412
          %s414 = sshll.u32 [#allocation10], 4
          %s415 = int_to_ptr.vmem [resolvable:$true] %s414
          %420 = dma.hbm_to_vmem [thread:$0]  %s4, 1024, %s415, [#allocation9], 64, 64, 4
        $region28: #{tpu_custom_call.1} parent=11 // pred_fallthru
          _
        // Predicated region
        $region29: #{tpu_custom_call.1} parent=11 // pred_check
          %p421 = pneg %p164
        $region30: #{tpu_custom_call.1} parent=11 // pred_check_branch
          %423 = sbr.rel (%p421) target = $region32
        $region31: #{tpu_custom_call.1} parent=11 // pred_region
          %s425 = ssub.s32 1024, 1024
          %426 = vsyncadd [#allocation12], %s425
          %s427 = sshll.u32 [#allocation11], 4
          %s428 = int_to_ptr.vmem [resolvable:$true] %s427
          %433 = dma.hbm_to_vmem [thread:$0]  %s5, 1024, %s428, [#allocation12], 64, 64, 4
        $region32: #{tpu_custom_call.1} parent=11 // pred_fallthru
          _
        // Predicated region
        $region33: #{tpu_custom_call.1} parent=11 // pred_check
          %p434 = pneg %p185
        $region34: #{tpu_custom_call.1} parent=11 // pred_check_branch
          %436 = sbr.rel (%p434) target = $region36
        $region35: #{tpu_custom_call.1} parent=11 // pred_region
          %s438 = ssub.s32 256, 256
          %439 = vsyncadd [#allocation12], %s438
          %s440 = sshll.u32 [#allocation13], 4
          %s441 = int_to_ptr.vmem [resolvable:$true] %s440
          %446 = dma.hbm_to_vmem [thread:$0]  %s6, 256, %s441, [#allocation12], 64, 64, 4
        $region36: #{tpu_custom_call.1} parent=11 // pred_fallthru
          _
        // Predicated region
        $region37: #{tpu_custom_call.1} parent=11 // pred_check
          %p447 = pneg %p206
        $region38: #{tpu_custom_call.1} parent=11 // pred_check_branch
          %449 = sbr.rel (%p447) target = $region40
        $region39: #{tpu_custom_call.1} parent=11 // pred_region
          %s451 = ssub.s32 16, 16
          %452 = vsyncadd [#allocation15], %s451
          %s454 = sshll.u32 [#allocation14], 4
          %s455 = int_to_ptr.vmem [resolvable:$true] %s454
          %457 = dma.hbm_to_vmem [thread:$0]  %s7, 16, %s455, [#allocation15]
        $region40: #{tpu_custom_call.1} parent=11 // pred_fallthru
          _
        // Predicated region
        $region41: #{tpu_custom_call.1} parent=11 // pred_check
          %p458 = pneg %p227
        $region42: #{tpu_custom_call.1} parent=11 // pred_check_branch
          %460 = sbr.rel (%p458) target = $region44
        $region43: #{tpu_custom_call.1} parent=11 // pred_region
          %s462 = ssub.s32 16, 16
          %463 = vsyncadd [#allocation15], %s462
          %s465 = sshll.u32 [#allocation16], 4
          %s466 = int_to_ptr.vmem [resolvable:$true] %s465
          %468 = dma.hbm_to_vmem [thread:$0]  %s8, 16, %s466, [#allocation15]
        $region44: #{tpu_custom_call.1} parent=11 // pred_fallthru
          _
        // Predicated region
        $region45: #{tpu_custom_call.1} parent=11 // pred_check
          %p469 = pneg %p248
        $region46: #{tpu_custom_call.1} parent=11 // pred_check_branch
          %471 = sbr.rel (%p469) target = $region48
        $region47: #{tpu_custom_call.1} parent=11 // pred_region
          %s473 = ssub.s32 16, 16
          %474 = vsyncadd [#allocation18], %s473
          %s476 = sshll.u32 [#allocation17], 4
          %s477 = int_to_ptr.vmem [resolvable:$true] %s476
          %479 = dma.hbm_to_vmem [thread:$0]  %s9, 16, %s477, [#allocation18]
        $region48: #{tpu_custom_call.1} parent=11 // pred_fallthru
          _
        // Predicated region
        $region49: #{tpu_custom_call.1} parent=11 // pred_check
          %p480 = pneg %p269
        $region50: #{tpu_custom_call.1} parent=11 // pred_check_branch
          %482 = sbr.rel (%p480) target = $region52
        $region51: #{tpu_custom_call.1} parent=11 // pred_region
          %s484 = ssub.s32 256, 256
          %485 = vsyncadd [#allocation18], %s484
          %s486 = sshll.u32 [#allocation19], 4
          %s487 = int_to_ptr.vmem [resolvable:$true] %s486
          %492 = dma.hbm_to_vmem [thread:$0]  %s10, 256, %s487, [#allocation18], 64, 64, 4
        $region52: #{tpu_custom_call.1} parent=11 // pred_fallthru
          _
        // Predicated region
        $region53: #{tpu_custom_call.1} parent=11 // pred_check
          %p493 = pneg %p290
        $region54: #{tpu_custom_call.1} parent=11 // pred_check_branch
          %495 = sbr.rel (%p493) target = $region56
        $region55: #{tpu_custom_call.1} parent=11 // pred_region
          %s497 = ssub.s32 16, 16
          %498 = vsyncadd [#allocation21], %s497
          %s500 = sshll.u32 [#allocation20], 4
          %s501 = int_to_ptr.vmem [resolvable:$true] %s500
          %503 = dma.hbm_to_vmem [thread:$0]  %s11, 16, %s501, [#allocation21]
        $region56: #{tpu_custom_call.1} parent=11 // pred_fallthru
          _
        // Predicated region
        $region57: #{tpu_custom_call.1} parent=11 // pred_check
          %p504 = pneg %p311
        $region58: #{tpu_custom_call.1} parent=11 // pred_check_branch
          %506 = sbr.rel (%p504) target = $region60
        $region59: #{tpu_custom_call.1} parent=11 // pred_region
          %s508 = ssub.s32 1024, 1024
          %509 = vsyncadd [#allocation21], %s508
          %s510 = sshll.u32 [#allocation22], 4
          %s511 = int_to_ptr.vmem [resolvable:$true] %s510
          %516 = dma.hbm_to_vmem [thread:$0]  %s12, 1024, %s511, [#allocation21], 64, 64, 4
        $region60: #{tpu_custom_call.1} parent=11 // pred_fallthru
          _
        // Predicated region
        $region61: #{tpu_custom_call.1} parent=11 // pred_check
          %p517 = pneg %p332
        $region62: #{tpu_custom_call.1} parent=11 // pred_check_branch
          %519 = sbr.rel (%p517) target = $region64
        $region63: #{tpu_custom_call.1} parent=11 // pred_region
          %s521 = ssub.s32 16, 16
          %522 = vsyncadd [#allocation24], %s521
          %s524 = sshll.u32 [#allocation23], 4
          %s525 = int_to_ptr.vmem [resolvable:$true] %s524
          %527 = dma.hbm_to_vmem [thread:$0]  %s13, 16, %s525, [#allocation24]
        $region64: #{tpu_custom_call.1} parent=11 // pred_fallthru
          _
      $region12: #{tpu_custom_call.1} parent=5 // pred_fallthru
        _
      %p528 = scmp.lt.s32.totalorder %s33, 2
      // Predicated region
      $region65: #{tpu_custom_call.1} parent=5 // pred_check
        %p529 = pneg %p528
      $region66: #{tpu_custom_call.1} parent=5 // pred_check_branch
        %531 = sbr.rel (%p529) target = $region68
      $region67: #{tpu_custom_call.1} parent=5 // pred_region
        // Predicated region
        $region69: #{tpu_custom_call.1} parent=67 // pred_check
          %p532 = pneg %p53
        $region70: #{tpu_custom_call.1} parent=67 // pred_check_branch
          %534 = sbr.rel (%p532) target = $region72
        $region71: #{tpu_custom_call.1} parent=67 // pred_region
          %s535 = sand.u32 %s43, 1
          %s536 = scalar_lea.sflag [#allocation3], %s535
          %s537 = sand.u32 %s43, 1
          %s538 = smul.addr %s537, 8
          %s539 = scalar_lea.vmem [#allocation2], %s538
          %s541 = ssub.s32 128, 128
          %542 = vsyncadd %s536, %s541
          %s543 = smul.addr %s33, 128
          %s544 = scalar_lea.hbm %s0, %s543
          %s546 = sshll.u32 %s539, 4
          %s547 = int_to_ptr.vmem [resolvable:$true] %s546
          %549 = dma.hbm_to_vmem [thread:$0]  %s544, 128, %s547, %s536
        $region72: #{tpu_custom_call.1} parent=67 // pred_fallthru
          _
      $region68: #{tpu_custom_call.1} parent=5 // pred_fallthru
        _
      %p550 = scmp.le.s32.totalorder 1, %s33
      %p551 = scmp.lt.s32.totalorder %s33, 3
      %p552 = pnand %p550, %p551
      %p553 = pneg %p552
      // Predicated region
      $region73: #{tpu_custom_call.1} parent=5 // pred_check
        _
      $region74: #{tpu_custom_call.1} parent=5 // pred_check_branch
        %555 = sbr.rel (%p552) target = $region76
      $region75: #{tpu_custom_call.1} parent=5 // pred_region
        %s556 = ssub.s32 %s33, 1
        %s557 = sand.u32 %s46, 1
        %s558 = scalar_lea.sflag [#allocation3], %s557
        %s559 = sand.u32 %s46, 1
        %s560 = smul.addr %s559, 8
        %s561 = scalar_lea.vmem [#allocation2], %s560
        // Predicated region
        $region77: #{tpu_custom_call.1} parent=75 // pred_check
          %p562 = pneg %p59
        $region78: #{tpu_custom_call.1} parent=75 // pred_check_branch
          %564 = sbr.rel (%p562) target = $region80
        $region79: #{tpu_custom_call.1} parent=75 // pred_region
          %565 = dma.done %s558, 128
        $region80: #{tpu_custom_call.1} parent=75 // pred_fallthru
          _
        // Predicated region
        $region81: #{tpu_custom_call.1} parent=75 // pred_check
          %p566 = pneg %p80
        $region82: #{tpu_custom_call.1} parent=75 // pred_check_branch
          %568 = sbr.rel (%p566) target = $region84
        $region83: #{tpu_custom_call.1} parent=75 // pred_region
          %569 = dma.done [#allocation6], 16
        $region84: #{tpu_custom_call.1} parent=75 // pred_fallthru
          _
        // Predicated region
        $region85: #{tpu_custom_call.1} parent=75 // pred_check
          %p570 = pneg %p101
        $region86: #{tpu_custom_call.1} parent=75 // pred_check_branch
          %572 = sbr.rel (%p570) target = $region88
        $region87: #{tpu_custom_call.1} parent=75 // pred_region
          %573 = dma.done [#allocation6], 16
        $region88: #{tpu_custom_call.1} parent=75 // pred_fallthru
          _
        // Predicated region
        $region89: #{tpu_custom_call.1} parent=75 // pred_check
          %p574 = pneg %p122
        $region90: #{tpu_custom_call.1} parent=75 // pred_check_branch
          %576 = sbr.rel (%p574) target = $region92
        $region91: #{tpu_custom_call.1} parent=75 // pred_region
          %577 = dma.done [#allocation9], 1024
        $region92: #{tpu_custom_call.1} parent=75 // pred_fallthru
          _
        // Predicated region
        $region93: #{tpu_custom_call.1} parent=75 // pred_check
          %p578 = pneg %p143
        $region94: #{tpu_custom_call.1} parent=75 // pred_check_branch
          %580 = sbr.rel (%p578) target = $region96
        $region95: #{tpu_custom_call.1} parent=75 // pred_region
          %581 = dma.done [#allocation9], 1024
        $region96: #{tpu_custom_call.1} parent=75 // pred_fallthru
          _
        // Predicated region
        $region97: #{tpu_custom_call.1} parent=75 // pred_check
          %p582 = pneg %p164
        $region98: #{tpu_custom_call.1} parent=75 // pred_check_branch
          %584 = sbr.rel (%p582) target = $region100
        $region99: #{tpu_custom_call.1} parent=75 // pred_region
          %585 = dma.done [#allocation12], 1024
        $region100: #{tpu_custom_call.1} parent=75 // pred_fallthru
          _
        // Predicated region
        $region101: #{tpu_custom_call.1} parent=75 // pred_check
          %p586 = pneg %p185
        $region102: #{tpu_custom_call.1} parent=75 // pred_check_branch
          %588 = sbr.rel (%p586) target = $region104
        $region103: #{tpu_custom_call.1} parent=75 // pred_region
          %589 = dma.done [#allocation12], 256
        $region104: #{tpu_custom_call.1} parent=75 // pred_fallthru
          _
        // Predicated region
        $region105: #{tpu_custom_call.1} parent=75 // pred_check
          %p590 = pneg %p206
        $region106: #{tpu_custom_call.1} parent=75 // pred_check_branch
          %592 = sbr.rel (%p590) target = $region108
        $region107: #{tpu_custom_call.1} parent=75 // pred_region
          %593 = dma.done [#allocation15], 16
        $region108: #{tpu_custom_call.1} parent=75 // pred_fallthru
          _
        // Predicated region
        $region109: #{tpu_custom_call.1} parent=75 // pred_check
          %p594 = pneg %p227
        $region110: #{tpu_custom_call.1} parent=75 // pred_check_branch
          %596 = sbr.rel (%p594) target = $region112
        $region111: #{tpu_custom_call.1} parent=75 // pred_region
          %597 = dma.done [#allocation15], 16
        $region112: #{tpu_custom_call.1} parent=75 // pred_fallthru
          _
        // Predicated region
        $region113: #{tpu_custom_call.1} parent=75 // pred_check
          %p598 = pneg %p248
        $region114: #{tpu_custom_call.1} parent=75 // pred_check_branch
          %600 = sbr.rel (%p598) target = $region116
        $region115: #{tpu_custom_call.1} parent=75 // pred_region
          %601 = dma.done [#allocation18], 16
        $region116: #{tpu_custom_call.1} parent=75 // pred_fallthru
          _
        // Predicated region
        $region117: #{tpu_custom_call.1} parent=75 // pred_check
          %p602 = pneg %p269
        $region118: #{tpu_custom_call.1} parent=75 // pred_check_branch
          %604 = sbr.rel (%p602) target = $region120
        $region119: #{tpu_custom_call.1} parent=75 // pred_region
          %605 = dma.done [#allocation18], 256
        $region120: #{tpu_custom_call.1} parent=75 // pred_fallthru
          _
        // Predicated region
        $region121: #{tpu_custom_call.1} parent=75 // pred_check
          %p606 = pneg %p290
        $region122: #{tpu_custom_call.1} parent=75 // pred_check_branch
          %608 = sbr.rel (%p606) target = $region124
        $region123: #{tpu_custom_call.1} parent=75 // pred_region
          %609 = dma.done [#allocation21], 16
        $region124: #{tpu_custom_call.1} parent=75 // pred_fallthru
          _
        // Predicated region
        $region125: #{tpu_custom_call.1} parent=75 // pred_check
          %p610 = pneg %p311
        $region126: #{tpu_custom_call.1} parent=75 // pred_check_branch
          %612 = sbr.rel (%p610) target = $region128
        $region127: #{tpu_custom_call.1} parent=75 // pred_region
          %613 = dma.done [#allocation21], 1024
        $region128: #{tpu_custom_call.1} parent=75 // pred_fallthru
          _
        // Predicated region
        $region129: #{tpu_custom_call.1} parent=75 // pred_check
          %p614 = pneg %p332
        $region130: #{tpu_custom_call.1} parent=75 // pred_check_branch
          %616 = sbr.rel (%p614) target = $region132
        $region131: #{tpu_custom_call.1} parent=75 // pred_region
          %617 = dma.done [#allocation24], 16
        $region132: #{tpu_custom_call.1} parent=75 // pred_fallthru
          _
        %s618 = sand.u32 %s46, 1
        %s619 = scalar_lea.sflag [#allocation3], %s618
        %s620 = sand.u32 %s46, 1
        %s621 = smul.addr %s620, 8
        %s622 = scalar_lea.vmem [#allocation2], %s621
        %p623 = pneg %p59
        %p624 = pneg %p56
        %p625 = pneg %p80
        %p626 = pneg %p77
        %p627 = pneg %p101
        %p628 = pneg %p98
        %p629 = pneg %p122
        %p630 = pneg %p119
        %p631 = pneg %p143
        %p632 = pneg %p140
        %p633 = pneg %p164
        %p634 = pneg %p161
        %p635 = pneg %p185
        %p636 = pneg %p182
        %p637 = pneg %p206
        %p638 = pneg %p203
        %p639 = pneg %p227
        %p640 = pneg %p224
        %p641 = pneg %p248
        %p642 = pneg %p245
        %p643 = pneg %p269
        %p644 = pneg %p266
        %p645 = pneg %p290
        %p646 = pneg %p287
        %p647 = pneg %p311
        %p648 = pneg %p308
        %p649 = pneg %p332
        %p650 = pneg %p329
        %p651 = pneg %p358
        %p652 = pneg %p355
        %s653 = sand.u32 %s345, 1
        %s654 = scalar_lea.sflag [#allocation4], %s653
        %s655 = sand.u32 %s345, 1
        %s656 = smul.addr %s655, 8
        %s657 = scalar_lea.vmem [#allocation25], %s656
        %v659 = vld [vmem:[%s561] sm:$0xff]
        %vm660 = vcmask 261120
        %v661 = vsel %vm660, %v659, 0.0
        %662 = vadd.xlane.f32.xlu0 %v661
        %v663 = vpop.xlane.xlu0 %662
        %v664 = vrcp.pop 32.0
        %v665 = vmul.f32 %v663, %v664
        %v666 = vsub.f32 %v659, %v665
        %v667 = vmul.f32 %v666, %v666
        %v668 = vsel %vm660, %v667, 0.0
        %669 = vadd.xlane.f32.xlu0 %v668
        %v670 = vpop.xlane.xlu0 %669
        %v671 = vmul.f32 %v670, %v664
        %v672 = vadd.f32 %v671, 1e-05
        %v673 = vrsqrt.pop %v672
        %v674 = vmul.f32 %v666, %v673
        %v675 = vld [vmem:[#allocation5] sm:$0x1]
        %v677 = vlaneseq
        %v678 = vshrl.u32 %v677, 7
        %v679 = vsub.s32 0, %v678
        %v680 = vrot.slane %v675, %v679
        %v682 = vmul.f32 %v674, %v680
        %v683 = vld [vmem:[#allocation7] sm:$0x1]
        %v685 = vlaneseq
        %v686 = vshrl.u32 %v685, 7
        %v687 = vsub.s32 0, %v686
        %v688 = vrot.slane %v683, %v687
        %v690 = vadd.f32 %v682, %v688
        %v691 = vpack.c.bf16 %v690, %v690
        %v692 = vld [vmem:[#allocation8] sm:$0xf]
        %v693 = vld [vmem:[#allocation8 + $0x4] sm:$0xf]
        %v694 = vld [vmem:[#allocation8 + $0x8] sm:$0xf]
        %v695 = vld [vmem:[#allocation8 + $0xc] sm:$0xf]
        %v696 = vld [vmem:[#allocation8 + $0x10] sm:$0xf]
        %v697 = vld [vmem:[#allocation8 + $0x14] sm:$0xf]
        %v698 = vld [vmem:[#allocation8 + $0x18] sm:$0xf]
        %v699 = vld [vmem:[#allocation8 + $0x1c] sm:$0xf]
        %v700 = vld [vmem:[#allocation8 + $0x20] sm:$0xf]
        %v701 = vld [vmem:[#allocation8 + $0x24] sm:$0xf]
        %v702 = vld [vmem:[#allocation8 + $0x28] sm:$0xf]
        %v703 = vld [vmem:[#allocation8 + $0x2c] sm:$0xf]
        %v704 = vld [vmem:[#allocation8 + $0x30] sm:$0xf]
        %v705 = vld [vmem:[#allocation8 + $0x34] sm:$0xf]
        %v706 = vld [vmem:[#allocation8 + $0x38] sm:$0xf]
        %v707 = vld [vmem:[#allocation8 + $0x3c] sm:$0xf]
        %v712 = vunpack.c.l.b16 %v692
        %v713 = vunpack.c.l.b16 %v693
        %v714 = vunpack.c.l.b16 %v694
        %v715 = vunpack.c.l.b16 %v695
        %v716 = vpack.c.b16 %v713, %v712
        %v717 = vpack.c.b16 %v715, %v714
        %v721 = vsel %vm660, %v691, 0
        %723 = vmatprep.subr.bf16.mxu0 0
        %724 = vmatpush1.bf16.msra.mxu0 %v716
        %725 = vmatprep.subr.bf16.mxu0 0
        %726 = vmatpush1.bf16.msra.mxu0 %v717
        %727 = vmatprep.subr.bf16.mxu0 0
        %728 = vmatpush1.bf16.msra.mxu0 0
        %729 = vmatprep.subr.bf16.mxu0 0
        %730 = vmatpush1.bf16.msra.mxu0 0
        %731 = vmatprep.subr.bf16.mxu0 0
        %732 = vmatpush1.bf16.msra.mxu0 0
        %733 = vmatprep.subr.bf16.mxu0 0
        %734 = vmatpush1.bf16.msra.mxu0 0
        %735 = vmatprep.subr.bf16.mxu0 0
        %736 = vmatpush1.bf16.msra.mxu0 0
        %737 = vmatprep.subr.bf16.mxu0 0
        %738 = vmatpush1.bf16.msra.mxu0 0
        %739 = vmatprep.subr.bf16.mxu0 0
        %740 = vmatpush1.bf16.msra.mxu0 0
        %741 = vmatprep.subr.bf16.mxu0 0
        %742 = vmatpush1.bf16.msra.mxu0 0
        %743 = vmatprep.subr.bf16.mxu0 0
        %744 = vmatpush1.bf16.msra.mxu0 0
        %745 = vmatprep.subr.bf16.mxu0 0
        %746 = vmatpush1.bf16.msra.mxu0 0
        %747 = vmatprep.subr.bf16.mxu0 0
        %748 = vmatpush1.bf16.msra.mxu0 0
        %749 = vmatprep.subr.bf16.mxu0 0
        %750 = vmatpush1.bf16.msra.mxu0 0
        %751 = vmatprep.subr.bf16.mxu0 0
        %752 = vmatpush1.bf16.msra.mxu0 0
        %753 = vmatprep.subr.bf16.mxu0 0
        %754 = vmatpush1.bf16.msra.mxu0 0
        %755 = vmatprep.mubr.bf16.mxu0 0
        %756 = vmatmul.mubr.bf16.gmra.mrb[0].mxu0 %v721
        %v757 = vpop.f32.mrb[0].mxu0
        %v758 = vadd.f32 0.0, %v757
        %v759 = vpop.f32.mrb[0].mxu0
        %v760 = vpop.f32.mrb[0].mxu0
        %v761 = vpop.f32.mrb[0].mxu0
        %762 = vdwg.mxu0
        %v767 = vunpack.c.l.b16 %v696
        %v768 = vunpack.c.l.b16 %v697
        %v769 = vunpack.c.l.b16 %v698
        %v770 = vunpack.c.l.b16 %v699
        %v771 = vpack.c.b16 %v768, %v767
        %v772 = vpack.c.b16 %v770, %v769
        %775 = vmatprep.subr.bf16.mxu0 0
        %776 = vmatpush1.bf16.msra.mxu0 %v771
        %777 = vmatprep.subr.bf16.mxu0 0
        %778 = vmatpush1.bf16.msra.mxu0 %v772
        %779 = vmatprep.subr.bf16.mxu0 0
        %780 = vmatpush1.bf16.msra.mxu0 0
        %781 = vmatprep.subr.bf16.mxu0 0
        %782 = vmatpush1.bf16.msra.mxu0 0
        %783 = vmatprep.subr.bf16.mxu0 0
        %784 = vmatpush1.bf16.msra.mxu0 0
        %785 = vmatprep.subr.bf16.mxu0 0
        %786 = vmatpush1.bf16.msra.mxu0 0
        %787 = vmatprep.subr.bf16.mxu0 0
        %788 = vmatpush1.bf16.msra.mxu0 0
        %789 = vmatprep.subr.bf16.mxu0 0
        %790 = vmatpush1.bf16.msra.mxu0 0
        %791 = vmatprep.subr.bf16.mxu0 0
        %792 = vmatpush1.bf16.msra.mxu0 0
        %793 = vmatprep.subr.bf16.mxu0 0
        %794 = vmatpush1.bf16.msra.mxu0 0
        %795 = vmatprep.subr.bf16.mxu0 0
        %796 = vmatpush1.bf16.msra.mxu0 0
        %797 = vmatprep.subr.bf16.mxu0 0
        %798 = vmatpush1.bf16.msra.mxu0 0
        %799 = vmatprep.subr.bf16.mxu0 0
        %800 = vmatpush1.bf16.msra.mxu0 0
        %801 = vmatprep.subr.bf16.mxu0 0
        %802 = vmatpush1.bf16.msra.mxu0 0
        %803 = vmatprep.subr.bf16.mxu0 0
        %804 = vmatpush1.bf16.msra.mxu0 0
        %805 = vmatprep.subr.bf16.mxu0 0
        %806 = vmatpush1.bf16.msra.mxu0 0
        %807 = vmatprep.mubr.bf16.mxu0 0
        %808 = vmatmul.mubr.bf16.gmra.mrb[0].mxu0 %v721
        %v809 = vpop.f32.mrb[0].mxu0
        %v810 = vadd.f32 0.0, %v809
        %v811 = vpop.f32.mrb[0].mxu0
        %v812 = vpop.f32.mrb[0].mxu0
        %v813 = vpop.f32.mrb[0].mxu0
        %814 = vdwg.mxu0
        %v819 = vunpack.c.l.b16 %v700
        %v820 = vunpack.c.l.b16 %v701
        %v821 = vunpack.c.l.b16 %v702
        %v822 = vunpack.c.l.b16 %v703
        %v823 = vpack.c.b16 %v820, %v819
        %v824 = vpack.c.b16 %v822, %v821
        %827 = vmatprep.subr.bf16.mxu0 0
        %828 = vmatpush1.bf16.msra.mxu0 %v823
        %829 = vmatprep.subr.bf16.mxu0 0
        %830 = vmatpush1.bf16.msra.mxu0 %v824
        %831 = vmatprep.subr.bf16.mxu0 0
        %832 = vmatpush1.bf16.msra.mxu0 0
        %833 = vmatprep.subr.bf16.mxu0 0
        %834 = vmatpush1.bf16.msra.mxu0 0
        %835 = vmatprep.subr.bf16.mxu0 0
        %836 = vmatpush1.bf16.msra.mxu0 0
        %837 = vmatprep.subr.bf16.mxu0 0
        %838 = vmatpush1.bf16.msra.mxu0 0
        %839 = vmatprep.subr.bf16.mxu0 0
        %840 = vmatpush1.bf16.msra.mxu0 0
        %841 = vmatprep.subr.bf16.mxu0 0
        %842 = vmatpush1.bf16.msra.mxu0 0
        %843 = vmatprep.subr.bf16.mxu0 0
        %844 = vmatpush1.bf16.msra.mxu0 0
        %845 = vmatprep.subr.bf16.mxu0 0
        %846 = vmatpush1.bf16.msra.mxu0 0
        %847 = vmatprep.subr.bf16.mxu0 0
        %848 = vmatpush1.bf16.msra.mxu0 0
        %849 = vmatprep.subr.bf16.mxu0 0
        %850 = vmatpush1.bf16.msra.mxu0 0
        %851 = vmatprep.subr.bf16.mxu0 0
        %852 = vmatpush1.bf16.msra.mxu0 0
        %853 = vmatprep.subr.bf16.mxu0 0
        %854 = vmatpush1.bf16.msra.mxu0 0
        %855 = vmatprep.subr.bf16.mxu0 0
        %856 = vmatpush1.bf16.msra.mxu0 0
        %857 = vmatprep.subr.bf16.mxu0 0
        %858 = vmatpush1.bf16.msra.mxu0 0
        %859 = vmatprep.mubr.bf16.mxu0 0
        %860 = vmatmul.mubr.bf16.gmra.mrb[0].mxu0 %v721
        %v861 = vpop.f32.mrb[0].mxu0
        %v862 = vadd.f32 0.0, %v861
        %v863 = vpop.f32.mrb[0].mxu0
        %v864 = vpop.f32.mrb[0].mxu0
        %v865 = vpop.f32.mrb[0].mxu0
        %866 = vdwg.mxu0
        %v871 = vunpack.c.l.b16 %v704
        %v872 = vunpack.c.l.b16 %v705
        %v873 = vunpack.c.l.b16 %v706
        %v874 = vunpack.c.l.b16 %v707
        %v875 = vpack.c.b16 %v872, %v871
        %v876 = vpack.c.b16 %v874, %v873
        %879 = vmatprep.subr.bf16.mxu0 0
        %880 = vmatpush1.bf16.msra.mxu0 %v875
        %881 = vmatprep.subr.bf16.mxu0 0
        %882 = vmatpush1.bf16.msra.mxu0 %v876
        %883 = vmatprep.subr.bf16.mxu0 0
        %884 = vmatpush1.bf16.msra.mxu0 0
        %885 = vmatprep.subr.bf16.mxu0 0
        %886 = vmatpush1.bf16.msra.mxu0 0
        %887 = vmatprep.subr.bf16.mxu0 0
        %888 = vmatpush1.bf16.msra.mxu0 0
        %889 = vmatprep.subr.bf16.mxu0 0
        %890 = vmatpush1.bf16.msra.mxu0 0
        %891 = vmatprep.subr.bf16.mxu0 0
        %892 = vmatpush1.bf16.msra.mxu0 0
        %893 = vmatprep.subr.bf16.mxu0 0
        %894 = vmatpush1.bf16.msra.mxu0 0
        %895 = vmatprep.subr.bf16.mxu0 0
        %896 = vmatpush1.bf16.msra.mxu0 0
        %897 = vmatprep.subr.bf16.mxu0 0
        %898 = vmatpush1.bf16.msra.mxu0 0
        %899 = vmatprep.subr.bf16.mxu0 0
        %900 = vmatpush1.bf16.msra.mxu0 0
        %901 = vmatprep.subr.bf16.mxu0 0
        %902 = vmatpush1.bf16.msra.mxu0 0
        %903 = vmatprep.subr.bf16.mxu0 0
        %904 = vmatpush1.bf16.msra.mxu0 0
        %905 = vmatprep.subr.bf16.mxu0 0
        %906 = vmatpush1.bf16.msra.mxu0 0
        %907 = vmatprep.subr.bf16.mxu0 0
        %908 = vmatpush1.bf16.msra.mxu0 0
        %909 = vmatprep.subr.bf16.mxu0 0
        %910 = vmatpush1.bf16.msra.mxu0 0
        %911 = vmatprep.mubr.bf16.mxu0 0
        %912 = vmatmul.mubr.bf16.gmra.mrb[0].mxu0 %v721
        %v913 = vpop.f32.mrb[0].mxu0
        %v914 = vadd.f32 0.0, %v913
        %v915 = vpop.f32.mrb[0].mxu0
        %v916 = vpop.f32.mrb[0].mxu0
        %v917 = vpop.f32.mrb[0].mxu0
        %918 = vdwg.mxu0
        %v919 = vld [vmem:[#allocation10] sm:$0xf]
        %v920 = vld [vmem:[#allocation10 + $0x4] sm:$0xf]
        %v921 = vld [vmem:[#allocation10 + $0x8] sm:$0xf]
        %v922 = vld [vmem:[#allocation10 + $0xc] sm:$0xf]
        %v923 = vld [vmem:[#allocation10 + $0x10] sm:$0xf]
        %v924 = vld [vmem:[#allocation10 + $0x14] sm:$0xf]
        %v925 = vld [vmem:[#allocation10 + $0x18] sm:$0xf]
        %v926 = vld [vmem:[#allocation10 + $0x1c] sm:$0xf]
        %v927 = vld [vmem:[#allocation10 + $0x20] sm:$0xf]
        %v928 = vld [vmem:[#allocation10 + $0x24] sm:$0xf]
        %v929 = vld [vmem:[#allocation10 + $0x28] sm:$0xf]
        %v930 = vld [vmem:[#allocation10 + $0x2c] sm:$0xf]
        %v931 = vld [vmem:[#allocation10 + $0x30] sm:$0xf]
        %v932 = vld [vmem:[#allocation10 + $0x34] sm:$0xf]
        %v933 = vld [vmem:[#allocation10 + $0x38] sm:$0xf]
        %v934 = vld [vmem:[#allocation10 + $0x3c] sm:$0xf]
        %v939 = vunpack.c.l.b16 %v919
        %v940 = vunpack.c.l.b16 %v920
        %v941 = vunpack.c.l.b16 %v921
        %v942 = vunpack.c.l.b16 %v922
        %v943 = vpack.c.b16 %v940, %v939
        %v944 = vpack.c.b16 %v942, %v941
        %947 = vmatprep.subr.bf16.mxu0 0
        %948 = vmatpush1.bf16.msra.mxu0 %v943
        %949 = vmatprep.subr.bf16.mxu0 0
        %950 = vmatpush1.bf16.msra.mxu0 %v944
        %951 = vmatprep.subr.bf16.mxu0 0
        %952 = vmatpush1.bf16.msra.mxu0 0
        %953 = vmatprep.subr.bf16.mxu0 0
        %954 = vmatpush1.bf16.msra.mxu0 0
        %955 = vmatprep.subr.bf16.mxu0 0
        %956 = vmatpush1.bf16.msra.mxu0 0
        %957 = vmatprep.subr.bf16.mxu0 0
        %958 = vmatpush1.bf16.msra.mxu0 0
        %959 = vmatprep.subr.bf16.mxu0 0
        %960 = vmatpush1.bf16.msra.mxu0 0
        %961 = vmatprep.subr.bf16.mxu0 0
        %962 = vmatpush1.bf16.msra.mxu0 0
        %963 = vmatprep.subr.bf16.mxu0 0
        %964 = vmatpush1.bf16.msra.mxu0 0
        %965 = vmatprep.subr.bf16.mxu0 0
        %966 = vmatpush1.bf16.msra.mxu0 0
        %967 = vmatprep.subr.bf16.mxu0 0
        %968 = vmatpush1.bf16.msra.mxu0 0
        %969 = vmatprep.subr.bf16.mxu0 0
        %970 = vmatpush1.bf16.msra.mxu0 0
        %971 = vmatprep.subr.bf16.mxu0 0
        %972 = vmatpush1.bf16.msra.mxu0 0
        %973 = vmatprep.subr.bf16.mxu0 0
        %974 = vmatpush1.bf16.msra.mxu0 0
        %975 = vmatprep.subr.bf16.mxu0 0
        %976 = vmatpush1.bf16.msra.mxu0 0
        %977 = vmatprep.subr.bf16.mxu0 0
        %978 = vmatpush1.bf16.msra.mxu0 0
        %979 = vmatprep.mubr.bf16.mxu0 0
        %980 = vmatmul.mubr.bf16.gmra.mrb[0].mxu0 %v721
        %v981 = vpop.f32.mrb[0].mxu0
        %v982 = vadd.f32 0.0, %v981
        %v983 = vpop.f32.mrb[0].mxu0
        %v984 = vpop.f32.mrb[0].mxu0
        %v985 = vpop.f32.mrb[0].mxu0
        %986 = vdwg.mxu0
        %v991 = vunpack.c.l.b16 %v923
        %v992 = vunpack.c.l.b16 %v924
        %v993 = vunpack.c.l.b16 %v925
        %v994 = vunpack.c.l.b16 %v926
        %v995 = vpack.c.b16 %v992, %v991
        %v996 = vpack.c.b16 %v994, %v993
        %999 = vmatprep.subr.bf16.mxu0 0
        %1000 = vmatpush1.bf16.msra.mxu0 %v995
        %1001 = vmatprep.subr.bf16.mxu0 0
        %1002 = vmatpush1.bf16.msra.mxu0 %v996
        %1003 = vmatprep.subr.bf16.mxu0 0
        %1004 = vmatpush1.bf16.msra.mxu0 0
        %1005 = vmatprep.subr.bf16.mxu0 0
        %1006 = vmatpush1.bf16.msra.mxu0 0
        %1007 = vmatprep.subr.bf16.mxu0 0
        %1008 = vmatpush1.bf16.msra.mxu0 0
        %1009 = vmatprep.subr.bf16.mxu0 0
        %1010 = vmatpush1.bf16.msra.mxu0 0
        %1011 = vmatprep.subr.bf16.mxu0 0
        %1012 = vmatpush1.bf16.msra.mxu0 0
        %1013 = vmatprep.subr.bf16.mxu0 0
        %1014 = vmatpush1.bf16.msra.mxu0 0
        %1015 = vmatprep.subr.bf16.mxu0 0
        %1016 = vmatpush1.bf16.msra.mxu0 0
        %1017 = vmatprep.subr.bf16.mxu0 0
        %1018 = vmatpush1.bf16.msra.mxu0 0
        %1019 = vmatprep.subr.bf16.mxu0 0
        %1020 = vmatpush1.bf16.msra.mxu0 0
        %1021 = vmatprep.subr.bf16.mxu0 0
        %1022 = vmatpush1.bf16.msra.mxu0 0
        %1023 = vmatprep.subr.bf16.mxu0 0
        %1024 = vmatpush1.bf16.msra.mxu0 0
        %1025 = vmatprep.subr.bf16.mxu0 0
        %1026 = vmatpush1.bf16.msra.mxu0 0
        %1027 = vmatprep.subr.bf16.mxu0 0
        %1028 = vmatpush1.bf16.msra.mxu0 0
        %1029 = vmatprep.subr.bf16.mxu0 0
        %1030 = vmatpush1.bf16.msra.mxu0 0
        %1031 = vmatprep.mubr.bf16.mxu0 0
        %1032 = vmatmul.mubr.bf16.gmra.mrb[0].mxu0 %v721
        %v1033 = vpop.f32.mrb[0].mxu0
        %v1034 = vadd.f32 0.0, %v1033
        %v1035 = vpop.f32.mrb[0].mxu0
        %v1036 = vpop.f32.mrb[0].mxu0
        %v1037 = vpop.f32.mrb[0].mxu0
        %1038 = vdwg.mxu0
        %v1043 = vunpack.c.l.b16 %v927
        %v1044 = vunpack.c.l.b16 %v928
        %v1045 = vunpack.c.l.b16 %v929
        %v1046 = vunpack.c.l.b16 %v930
        %v1047 = vpack.c.b16 %v1044, %v1043
        %v1048 = vpack.c.b16 %v1046, %v1045
        %1051 = vmatprep.subr.bf16.mxu0 0
        %1052 = vmatpush1.bf16.msra.mxu0 %v1047
        %1053 = vmatprep.subr.bf16.mxu0 0
        %1054 = vmatpush1.bf16.msra.mxu0 %v1048
        %1055 = vmatprep.subr.bf16.mxu0 0
        %1056 = vmatpush1.bf16.msra.mxu0 0
        %1057 = vmatprep.subr.bf16.mxu0 0
        %1058 = vmatpush1.bf16.msra.mxu0 0
        %1059 = vmatprep.subr.bf16.mxu0 0
        %1060 = vmatpush1.bf16.msra.mxu0 0
        %1061 = vmatprep.subr.bf16.mxu0 0
        %1062 = vmatpush1.bf16.msra.mxu0 0
        %1063 = vmatprep.subr.bf16.mxu0 0
        %1064 = vmatpush1.bf16.msra.mxu0 0
        %1065 = vmatprep.subr.bf16.mxu0 0
        %1066 = vmatpush1.bf16.msra.mxu0 0
        %1067 = vmatprep.subr.bf16.mxu0 0
        %1068 = vmatpush1.bf16.msra.mxu0 0
        %1069 = vmatprep.subr.bf16.mxu0 0
        %1070 = vmatpush1.bf16.msra.mxu0 0
        %1071 = vmatprep.subr.bf16.mxu0 0
        %1072 = vmatpush1.bf16.msra.mxu0 0
        %1073 = vmatprep.subr.bf16.mxu0 0
        %1074 = vmatpush1.bf16.msra.mxu0 0
        %1075 = vmatprep.subr.bf16.mxu0 0
        %1076 = vmatpush1.bf16.msra.mxu0 0
        %1077 = vmatprep.subr.bf16.mxu0 0
        %1078 = vmatpush1.bf16.msra.mxu0 0
        %1079 = vmatprep.subr.bf16.mxu0 0
        %1080 = vmatpush1.bf16.msra.mxu0 0
        %1081 = vmatprep.subr.bf16.mxu0 0
        %1082 = vmatpush1.bf16.msra.mxu0 0
        %1083 = vmatprep.mubr.bf16.mxu0 0
        %1084 = vmatmul.mubr.bf16.gmra.mrb[0].mxu0 %v721
        %v1085 = vpop.f32.mrb[0].mxu0
        %v1086 = vadd.f32 0.0, %v1085
        %v1087 = vpop.f32.mrb[0].mxu0
        %v1088 = vpop.f32.mrb[0].mxu0
        %v1089 = vpop.f32.mrb[0].mxu0
        %1090 = vdwg.mxu0
        %v1095 = vunpack.c.l.b16 %v931
        %v1096 = vunpack.c.l.b16 %v932
        %v1097 = vunpack.c.l.b16 %v933
        %v1098 = vunpack.c.l.b16 %v934
        %v1099 = vpack.c.b16 %v1096, %v1095
        %v1100 = vpack.c.b16 %v1098, %v1097
        %1103 = vmatprep.subr.bf16.mxu0 0
        %1104 = vmatpush1.bf16.msra.mxu0 %v1099
        %1105 = vmatprep.subr.bf16.mxu0 0
        %1106 = vmatpush1.bf16.msra.mxu0 %v1100
        %1107 = vmatprep.subr.bf16.mxu0 0
        %1108 = vmatpush1.bf16.msra.mxu0 0
        %1109 = vmatprep.subr.bf16.mxu0 0
        %1110 = vmatpush1.bf16.msra.mxu0 0
        %1111 = vmatprep.subr.bf16.mxu0 0
        %1112 = vmatpush1.bf16.msra.mxu0 0
        %1113 = vmatprep.subr.bf16.mxu0 0
        %1114 = vmatpush1.bf16.msra.mxu0 0
        %1115 = vmatprep.subr.bf16.mxu0 0
        %1116 = vmatpush1.bf16.msra.mxu0 0
        %1117 = vmatprep.subr.bf16.mxu0 0
        %1118 = vmatpush1.bf16.msra.mxu0 0
        %1119 = vmatprep.subr.bf16.mxu0 0
        %1120 = vmatpush1.bf16.msra.mxu0 0
        %1121 = vmatprep.subr.bf16.mxu0 0
        %1122 = vmatpush1.bf16.msra.mxu0 0
        %1123 = vmatprep.subr.bf16.mxu0 0
        %1124 = vmatpush1.bf16.msra.mxu0 0
        %1125 = vmatprep.subr.bf16.mxu0 0
        %1126 = vmatpush1.bf16.msra.mxu0 0
        %1127 = vmatprep.subr.bf16.mxu0 0
        %1128 = vmatpush1.bf16.msra.mxu0 0
        %1129 = vmatprep.subr.bf16.mxu0 0
        %1130 = vmatpush1.bf16.msra.mxu0 0
        %1131 = vmatprep.subr.bf16.mxu0 0
        %1132 = vmatpush1.bf16.msra.mxu0 0
        %1133 = vmatprep.subr.bf16.mxu0 0
        %1134 = vmatpush1.bf16.msra.mxu0 0
        %1135 = vmatprep.mubr.bf16.mxu0 0
        %1136 = vmatmul.mubr.bf16.gmra.mrb[0].mxu0 %v721
        %v1137 = vpop.f32.mrb[0].mxu0
        %v1138 = vadd.f32 0.0, %v1137
        %v1139 = vpop.f32.mrb[0].mxu0
        %v1140 = vpop.f32.mrb[0].mxu0
        %v1141 = vpop.f32.mrb[0].mxu0
        %1142 = vdwg.mxu0
        %v1143 = vld [vmem:[#allocation11] sm:$0xf]
        %v1144 = vld [vmem:[#allocation11 + $0x4] sm:$0xf]
        %v1145 = vld [vmem:[#allocation11 + $0x8] sm:$0xf]
        %v1146 = vld [vmem:[#allocation11 + $0xc] sm:$0xf]
        %v1147 = vld [vmem:[#allocation11 + $0x10] sm:$0xf]
        %v1148 = vld [vmem:[#allocation11 + $0x14] sm:$0xf]
        %v1149 = vld [vmem:[#allocation11 + $0x18] sm:$0xf]
        %v1150 = vld [vmem:[#allocation11 + $0x1c] sm:$0xf]
        %v1151 = vld [vmem:[#allocation11 + $0x20] sm:$0xf]
        %v1152 = vld [vmem:[#allocation11 + $0x24] sm:$0xf]
        %v1153 = vld [vmem:[#allocation11 + $0x28] sm:$0xf]
        %v1154 = vld [vmem:[#allocation11 + $0x2c] sm:$0xf]
        %v1155 = vld [vmem:[#allocation11 + $0x30] sm:$0xf]
        %v1156 = vld [vmem:[#allocation11 + $0x34] sm:$0xf]
        %v1157 = vld [vmem:[#allocation11 + $0x38] sm:$0xf]
        %v1158 = vld [vmem:[#allocation11 + $0x3c] sm:$0xf]
        %v1163 = vunpack.c.l.b16 %v1143
        %v1164 = vunpack.c.l.b16 %v1144
        %v1165 = vunpack.c.l.b16 %v1145
        %v1166 = vunpack.c.l.b16 %v1146
        %v1167 = vpack.c.b16 %v1164, %v1163
        %v1168 = vpack.c.b16 %v1166, %v1165
        %1171 = vmatprep.subr.bf16.mxu0 0
        %1172 = vmatpush1.bf16.msra.mxu0 %v1167
        %1173 = vmatprep.subr.bf16.mxu0 0
        %1174 = vmatpush1.bf16.msra.mxu0 %v1168
        %1175 = vmatprep.subr.bf16.mxu0 0
        %1176 = vmatpush1.bf16.msra.mxu0 0
        %1177 = vmatprep.subr.bf16.mxu0 0
        %1178 = vmatpush1.bf16.msra.mxu0 0
        %1179 = vmatprep.subr.bf16.mxu0 0
        %1180 = vmatpush1.bf16.msra.mxu0 0
        %1181 = vmatprep.subr.bf16.mxu0 0
        %1182 = vmatpush1.bf16.msra.mxu0 0
        %1183 = vmatprep.subr.bf16.mxu0 0
        %1184 = vmatpush1.bf16.msra.mxu0 0
        %1185 = vmatprep.subr.bf16.mxu0 0
        %1186 = vmatpush1.bf16.msra.mxu0 0
        %1187 = vmatprep.subr.bf16.mxu0 0
        %1188 = vmatpush1.bf16.msra.mxu0 0
        %1189 = vmatprep.subr.bf16.mxu0 0
        %1190 = vmatpush1.bf16.msra.mxu0 0
        %1191 = vmatprep.subr.bf16.mxu0 0
        %1192 = vmatpush1.bf16.msra.mxu0 0
        %1193 = vmatprep.subr.bf16.mxu0 0
        %1194 = vmatpush1.bf16.msra.mxu0 0
        %1195 = vmatprep.subr.bf16.mxu0 0
        %1196 = vmatpush1.bf16.msra.mxu0 0
        %1197 = vmatprep.subr.bf16.mxu0 0
        %1198 = vmatpush1.bf16.msra.mxu0 0
        %1199 = vmatprep.subr.bf16.mxu0 0
        %1200 = vmatpush1.bf16.msra.mxu0 0
        %1201 = vmatprep.subr.bf16.mxu0 0
        %1202 = vmatpush1.bf16.msra.mxu0 0
        %1203 = vmatprep.mubr.bf16.mxu0 0
        %1204 = vmatmul.mubr.bf16.gmra.mrb[0].mxu0 %v721
        %v1205 = vpop.f32.mrb[0].mxu0
        %v1206 = vadd.f32 0.0, %v1205
        %v1207 = vpop.f32.mrb[0].mxu0
        %v1208 = vpop.f32.mrb[0].mxu0
        %v1209 = vpop.f32.mrb[0].mxu0
        %1210 = vdwg.mxu0
        %v1215 = vunpack.c.l.b16 %v1147
        %v1216 = vunpack.c.l.b16 %v1148
        %v1217 = vunpack.c.l.b16 %v1149
        %v1218 = vunpack.c.l.b16 %v1150
        %v1219 = vpack.c.b16 %v1216, %v1215
        %v1220 = vpack.c.b16 %v1218, %v1217
        %1223 = vmatprep.subr.bf16.mxu0 0
        %1224 = vmatpush1.bf16.msra.mxu0 %v1219
        %1225 = vmatprep.subr.bf16.mxu0 0
        %1226 = vmatpush1.bf16.msra.mxu0 %v1220
        %1227 = vmatprep.subr.bf16.mxu0 0
        %1228 = vmatpush1.bf16.msra.mxu0 0
        %1229 = vmatprep.subr.bf16.mxu0 0
        %1230 = vmatpush1.bf16.msra.mxu0 0
        %1231 = vmatprep.subr.bf16.mxu0 0
        %1232 = vmatpush1.bf16.msra.mxu0 0
        %1233 = vmatprep.subr.bf16.mxu0 0
        %1234 = vmatpush1.bf16.msra.mxu0 0
        %1235 = vmatprep.subr.bf16.mxu0 0
        %1236 = vmatpush1.bf16.msra.mxu0 0
        %1237 = vmatprep.subr.bf16.mxu0 0
        %1238 = vmatpush1.bf16.msra.mxu0 0
        %1239 = vmatprep.subr.bf16.mxu0 0
        %1240 = vmatpush1.bf16.msra.mxu0 0
        %1241 = vmatprep.subr.bf16.mxu0 0
        %1242 = vmatpush1.bf16.msra.mxu0 0
        %1243 = vmatprep.subr.bf16.mxu0 0
        %1244 = vmatpush1.bf16.msra.mxu0 0
        %1245 = vmatprep.subr.bf16.mxu0 0
        %1246 = vmatpush1.bf16.msra.mxu0 0
        %1247 = vmatprep.subr.bf16.mxu0 0
        %1248 = vmatpush1.bf16.msra.mxu0 0
        %1249 = vmatprep.subr.bf16.mxu0 0
        %1250 = vmatpush1.bf16.msra.mxu0 0
        %1251 = vmatprep.subr.bf16.mxu0 0
        %1252 = vmatpush1.bf16.msra.mxu0 0
        %1253 = vmatprep.subr.bf16.mxu0 0
        %1254 = vmatpush1.bf16.msra.mxu0 0
        %1255 = vmatprep.mubr.bf16.mxu0 0
        %1256 = vmatmul.mubr.bf16.gmra.mrb[0].mxu0 %v721
        %v1257 = vpop.f32.mrb[0].mxu0
        %v1258 = vadd.f32 0.0, %v1257
        %v1259 = vpop.f32.mrb[0].mxu0
        %v1260 = vpop.f32.mrb[0].mxu0
        %v1261 = vpop.f32.mrb[0].mxu0
        %1262 = vdwg.mxu0
        %v1267 = vunpack.c.l.b16 %v1151
        %v1268 = vunpack.c.l.b16 %v1152
        %v1269 = vunpack.c.l.b16 %v1153
        %v1270 = vunpack.c.l.b16 %v1154
        %v1271 = vpack.c.b16 %v1268, %v1267
        %v1272 = vpack.c.b16 %v1270, %v1269
        %1275 = vmatprep.subr.bf16.mxu0 0
        %1276 = vmatpush1.bf16.msra.mxu0 %v1271
        %1277 = vmatprep.subr.bf16.mxu0 0
        %1278 = vmatpush1.bf16.msra.mxu0 %v1272
        %1279 = vmatprep.subr.bf16.mxu0 0
        %1280 = vmatpush1.bf16.msra.mxu0 0
        %1281 = vmatprep.subr.bf16.mxu0 0
        %1282 = vmatpush1.bf16.msra.mxu0 0
        %1283 = vmatprep.subr.bf16.mxu0 0
        %1284 = vmatpush1.bf16.msra.mxu0 0
        %1285 = vmatprep.subr.bf16.mxu0 0
        %1286 = vmatpush1.bf16.msra.mxu0 0
        %1287 = vmatprep.subr.bf16.mxu0 0
        %1288 = vmatpush1.bf16.msra.mxu0 0
        %1289 = vmatprep.subr.bf16.mxu0 0
        %1290 = vmatpush1.bf16.msra.mxu0 0
        %1291 = vmatprep.subr.bf16.mxu0 0
        %1292 = vmatpush1.bf16.msra.mxu0 0
        %1293 = vmatprep.subr.bf16.mxu0 0
        %1294 = vmatpush1.bf16.msra.mxu0 0
        %1295 = vmatprep.subr.bf16.mxu0 0
        %1296 = vmatpush1.bf16.msra.mxu0 0
        %1297 = vmatprep.subr.bf16.mxu0 0
        %1298 = vmatpush1.bf16.msra.mxu0 0
        %1299 = vmatprep.subr.bf16.mxu0 0
        %1300 = vmatpush1.bf16.msra.mxu0 0
        %1301 = vmatprep.subr.bf16.mxu0 0
        %1302 = vmatpush1.bf16.msra.mxu0 0
        %1303 = vmatprep.subr.bf16.mxu0 0
        %1304 = vmatpush1.bf16.msra.mxu0 0
        %1305 = vmatprep.subr.bf16.mxu0 0
        %1306 = vmatpush1.bf16.msra.mxu0 0
        %1307 = vmatprep.mubr.bf16.mxu0 0
        %1308 = vmatmul.mubr.bf16.gmra.mrb[0].mxu0 %v721
        %v1309 = vpop.f32.mrb[0].mxu0
        %v1310 = vadd.f32 0.0, %v1309
        %v1311 = vpop.f32.mrb[0].mxu0
        %v1312 = vpop.f32.mrb[0].mxu0
        %v1313 = vpop.f32.mrb[0].mxu0
        %1314 = vdwg.mxu0
        %v1319 = vunpack.c.l.b16 %v1155
        %v1320 = vunpack.c.l.b16 %v1156
        %v1321 = vunpack.c.l.b16 %v1157
        %v1322 = vunpack.c.l.b16 %v1158
        %v1323 = vpack.c.b16 %v1320, %v1319
        %v1324 = vpack.c.b16 %v1322, %v1321
        %1327 = vmatprep.subr.bf16.mxu0 0
        %1328 = vmatpush1.bf16.msra.mxu0 %v1323
        %1329 = vmatprep.subr.bf16.mxu0 0
        %1330 = vmatpush1.bf16.msra.mxu0 %v1324
        %1331 = vmatprep.subr.bf16.mxu0 0
        %1332 = vmatpush1.bf16.msra.mxu0 0
        %1333 = vmatprep.subr.bf16.mxu0 0
        %1334 = vmatpush1.bf16.msra.mxu0 0
        %1335 = vmatprep.subr.bf16.mxu0 0
        %1336 = vmatpush1.bf16.msra.mxu0 0
        %1337 = vmatprep.subr.bf16.mxu0 0
        %1338 = vmatpush1.bf16.msra.mxu0 0
        %1339 = vmatprep.subr.bf16.mxu0 0
        %1340 = vmatpush1.bf16.msra.mxu0 0
        %1341 = vmatprep.subr.bf16.mxu0 0
        %1342 = vmatpush1.bf16.msra.mxu0 0
        %1343 = vmatprep.subr.bf16.mxu0 0
        %1344 = vmatpush1.bf16.msra.mxu0 0
        %1345 = vmatprep.subr.bf16.mxu0 0
        %1346 = vmatpush1.bf16.msra.mxu0 0
        %1347 = vmatprep.subr.bf16.mxu0 0
        %1348 = vmatpush1.bf16.msra.mxu0 0
        %1349 = vmatprep.subr.bf16.mxu0 0
        %1350 = vmatpush1.bf16.msra.mxu0 0
        %1351 = vmatprep.subr.bf16.mxu0 0
        %1352 = vmatpush1.bf16.msra.mxu0 0
        %1353 = vmatprep.subr.bf16.mxu0 0
        %1354 = vmatpush1.bf16.msra.mxu0 0
        %1355 = vmatprep.subr.bf16.mxu0 0
        %1356 = vmatpush1.bf16.msra.mxu0 0
        %1357 = vmatprep.subr.bf16.mxu0 0
        %1358 = vmatpush1.bf16.msra.mxu0 0
        %1359 = vmatprep.mubr.bf16.mxu0 0
        %1360 = vmatmul.mubr.bf16.gmra.mrb[0].mxu0 %v721
        %v1361 = vpop.f32.mrb[0].mxu0
        %v1362 = vadd.f32 0.0, %v1361
        %v1363 = vpop.f32.mrb[0].mxu0
        %v1364 = vpop.f32.mrb[0].mxu0
        %v1365 = vpop.f32.mrb[0].mxu0
        %1366 = vdwg.mxu0
        %v1367 = vpack.c.bf16 %v758, %v758
        %v1368 = vpack.c.bf16 %v810, %v810
        %v1369 = vpack.c.bf16 %v862, %v862
        %v1370 = vpack.c.bf16 %v914, %v914
        %v1371 = vpack.c.bf16 %v982, %v982
        %v1372 = vpack.c.bf16 %v1034, %v1034
        %v1373 = vpack.c.bf16 %v1086, %v1086
        %v1374 = vpack.c.bf16 %v1138, %v1138
        %vm1375 = vcmask 64512
        %v1377 = vsel %vm1375, %v1367, 0
        %v1380 = vsel %vm1375, %v1371, 0
        %1382 = vmatprep.subr.bf16.mxu0 0
        %1383 = vmatpush1.bf16.xpose.msra.mxu0 %v1380
        %1384 = vmatprep.subr.bf16.mxu0 0
        %1385 = vmatpush1.bf16.xpose.msra.mxu0 0
        %1386 = vmatprep.subr.bf16.mxu0 0
        %1387 = vmatpush1.bf16.xpose.msra.mxu0 0
        %1388 = vmatprep.subr.bf16.mxu0 0
        %1389 = vmatpush1.bf16.xpose.msra.mxu0 0
        %1390 = vmatprep.subr.bf16.mxu0 0
        %1391 = vmatpush1.bf16.xpose.msra.mxu0 0
        %1392 = vmatprep.subr.bf16.mxu0 0
        %1393 = vmatpush1.bf16.xpose.msra.mxu0 0
        %1394 = vmatprep.subr.bf16.mxu0 0
        %1395 = vmatpush1.bf16.xpose.msra.mxu0 0
        %1396 = vmatprep.subr.bf16.mxu0 0
        %1397 = vmatpush1.bf16.xpose.msra.mxu0 0
        %1398 = vmatprep.subr.bf16.mxu0 0
        %1399 = vmatpush1.bf16.xpose.msra.mxu0 0
        %1400 = vmatprep.subr.bf16.mxu0 0
        %1401 = vmatpush1.bf16.xpose.msra.mxu0 0
        %1402 = vmatprep.subr.bf16.mxu0 0
        %1403 = vmatpush1.bf16.xpose.msra.mxu0 0
        %1404 = vmatprep.subr.bf16.mxu0 0
        %1405 = vmatpush1.bf16.xpose.msra.mxu0 0
        %1406 = vmatprep.subr.bf16.mxu0 0
        %1407 = vmatpush1.bf16.xpose.msra.mxu0 0
        %1408 = vmatprep.subr.bf16.mxu0 0
        %1409 = vmatpush1.bf16.xpose.msra.mxu0 0
        %1410 = vmatprep.subr.bf16.mxu0 0
        %1411 = vmatpush1.bf16.xpose.msra.mxu0 0
        %1412 = vmatprep.subr.bf16.mxu0 0
        %1413 = vmatpush1.bf16.xpose.msra.mxu0 0
        %1414 = vmatprep.mubr.bf16.mxu0 0
        %1415 = vmatmul.mubr.bf16.gmra.mrb[0].mxu0 %v1377
        %v1416 = vpop.f32.mrb[0].mxu0
        %v1417 = vadd.f32 0.0, %v1416
        %v1418 = vpop.f32.mrb[0].mxu0
        %v1419 = vpop.f32.mrb[0].mxu0
        %v1420 = vpop.f32.mrb[0].mxu0
        %1421 = vdwg.mxu0
        %v1423 = vsel %vm1375, %v1368, 0
        %v1426 = vsel %vm1375, %v1372, 0
        %1428 = vmatprep.subr.bf16.mxu0 0
        %1429 = vmatpush1.bf16.xpose.msra.mxu0 %v1426
        %1430 = vmatprep.subr.bf16.mxu0 0
        %1431 = vmatpush1.bf16.xpose.msra.mxu0 0
        %1432 = vmatprep.subr.bf16.mxu0 0
        %1433 = vmatpush1.bf16.xpose.msra.mxu0 0
        %1434 = vmatprep.subr.bf16.mxu0 0
        %1435 = vmatpush1.bf16.xpose.msra.mxu0 0
        %1436 = vmatprep.subr.bf16.mxu0 0
        %1437 = vmatpush1.bf16.xpose.msra.mxu0 0
        %1438 = vmatprep.subr.bf16.mxu0 0
        %1439 = vmatpush1.bf16.xpose.msra.mxu0 0
        %1440 = vmatprep.subr.bf16.mxu0 0
        %1441 = vmatpush1.bf16.xpose.msra.mxu0 0
        %1442 = vmatprep.subr.bf16.mxu0 0
        %1443 = vmatpush1.bf16.xpose.msra.mxu0 0
        %1444 = vmatprep.subr.bf16.mxu0 0
        %1445 = vmatpush1.bf16.xpose.msra.mxu0 0
        %1446 = vmatprep.subr.bf16.mxu0 0
        %1447 = vmatpush1.bf16.xpose.msra.mxu0 0
        %1448 = vmatprep.subr.bf16.mxu0 0
        %1449 = vmatpush1.bf16.xpose.msra.mxu0 0
        %1450 = vmatprep.subr.bf16.mxu0 0
        %1451 = vmatpush1.bf16.xpose.msra.mxu0 0
        %1452 = vmatprep.subr.bf16.mxu0 0
        %1453 = vmatpush1.bf16.xpose.msra.mxu0 0
        %1454 = vmatprep.subr.bf16.mxu0 0
        %1455 = vmatpush1.bf16.xpose.msra.mxu0 0
        %1456 = vmatprep.subr.bf16.mxu0 0
        %1457 = vmatpush1.bf16.xpose.msra.mxu0 0
        %1458 = vmatprep.subr.bf16.mxu0 0
        %1459 = vmatpush1.bf16.xpose.msra.mxu0 0
        %1460 = vmatprep.mubr.bf16.mxu0 0
        %1461 = vmatmul.mubr.bf16.gmra.mrb[0].mxu0 %v1423
        %v1462 = vpop.f32.mrb[0].mxu0
        %v1463 = vadd.f32 0.0, %v1462
        %v1464 = vpop.f32.mrb[0].mxu0
        %v1465 = vpop.f32.mrb[0].mxu0
        %v1466 = vpop.f32.mrb[0].mxu0
        %1467 = vdwg.mxu0
        %v1469 = vsel %vm1375, %v1369, 0
        %v1472 = vsel %vm1375, %v1373, 0
        %1474 = vmatprep.subr.bf16.mxu0 0
        %1475 = vmatpush1.bf16.xpose.msra.mxu0 %v1472
        %1476 = vmatprep.subr.bf16.mxu0 0
        %1477 = vmatpush1.bf16.xpose.msra.mxu0 0
        %1478 = vmatprep.subr.bf16.mxu0 0
        %1479 = vmatpush1.bf16.xpose.msra.mxu0 0
        %1480 = vmatprep.subr.bf16.mxu0 0
        %1481 = vmatpush1.bf16.xpose.msra.mxu0 0
        %1482 = vmatprep.subr.bf16.mxu0 0
        %1483 = vmatpush1.bf16.xpose.msra.mxu0 0
        %1484 = vmatprep.subr.bf16.mxu0 0
        %1485 = vmatpush1.bf16.xpose.msra.mxu0 0
        %1486 = vmatprep.subr.bf16.mxu0 0
        %1487 = vmatpush1.bf16.xpose.msra.mxu0 0
        %1488 = vmatprep.subr.bf16.mxu0 0
        %1489 = vmatpush1.bf16.xpose.msra.mxu0 0
        %1490 = vmatprep.subr.bf16.mxu0 0
        %1491 = vmatpush1.bf16.xpose.msra.mxu0 0
        %1492 = vmatprep.subr.bf16.mxu0 0
        %1493 = vmatpush1.bf16.xpose.msra.mxu0 0
        %1494 = vmatprep.subr.bf16.mxu0 0
        %1495 = vmatpush1.bf16.xpose.msra.mxu0 0
        %1496 = vmatprep.subr.bf16.mxu0 0
        %1497 = vmatpush1.bf16.xpose.msra.mxu0 0
        %1498 = vmatprep.subr.bf16.mxu0 0
        %1499 = vmatpush1.bf16.xpose.msra.mxu0 0
        %1500 = vmatprep.subr.bf16.mxu0 0
        %1501 = vmatpush1.bf16.xpose.msra.mxu0 0
        %1502 = vmatprep.subr.bf16.mxu0 0
        %1503 = vmatpush1.bf16.xpose.msra.mxu0 0
        %1504 = vmatprep.subr.bf16.mxu0 0
        %1505 = vmatpush1.bf16.xpose.msra.mxu0 0
        %1506 = vmatprep.mubr.bf16.mxu0 0
        %1507 = vmatmul.mubr.bf16.gmra.mrb[0].mxu0 %v1469
        %v1508 = vpop.f32.mrb[0].mxu0
        %v1509 = vadd.f32 0.0, %v1508
        %v1510 = vpop.f32.mrb[0].mxu0
        %v1511 = vpop.f32.mrb[0].mxu0
        %v1512 = vpop.f32.mrb[0].mxu0
        %1513 = vdwg.mxu0
        %v1515 = vsel %vm1375, %v1370, 0
        %v1518 = vsel %vm1375, %v1374, 0
        %1520 = vmatprep.subr.bf16.mxu0 0
        %1521 = vmatpush1.bf16.xpose.msra.mxu0 %v1518
        %1522 = vmatprep.subr.bf16.mxu0 0
        %1523 = vmatpush1.bf16.xpose.msra.mxu0 0
        %1524 = vmatprep.subr.bf16.mxu0 0
        %1525 = vmatpush1.bf16.xpose.msra.mxu0 0
        %1526 = vmatprep.subr.bf16.mxu0 0
        %1527 = vmatpush1.bf16.xpose.msra.mxu0 0
        %1528 = vmatprep.subr.bf16.mxu0 0
        %1529 = vmatpush1.bf16.xpose.msra.mxu0 0
        %1530 = vmatprep.subr.bf16.mxu0 0
        %1531 = vmatpush1.bf16.xpose.msra.mxu0 0
        %1532 = vmatprep.subr.bf16.mxu0 0
        %1533 = vmatpush1.bf16.xpose.msra.mxu0 0
        %1534 = vmatprep.subr.bf16.mxu0 0
        %1535 = vmatpush1.bf16.xpose.msra.mxu0 0
        %1536 = vmatprep.subr.bf16.mxu0 0
        %1537 = vmatpush1.bf16.xpose.msra.mxu0 0
        %1538 = vmatprep.subr.bf16.mxu0 0
        %1539 = vmatpush1.bf16.xpose.msra.mxu0 0
        %1540 = vmatprep.subr.bf16.mxu0 0
        %1541 = vmatpush1.bf16.xpose.msra.mxu0 0
        %1542 = vmatprep.subr.bf16.mxu0 0
        %1543 = vmatpush1.bf16.xpose.msra.mxu0 0
        %1544 = vmatprep.subr.bf16.mxu0 0
        %1545 = vmatpush1.bf16.xpose.msra.mxu0 0
        %1546 = vmatprep.subr.bf16.mxu0 0
        %1547 = vmatpush1.bf16.xpose.msra.mxu0 0
        %1548 = vmatprep.subr.bf16.mxu0 0
        %1549 = vmatpush1.bf16.xpose.msra.mxu0 0
        %1550 = vmatprep.subr.bf16.mxu0 0
        %1551 = vmatpush1.bf16.xpose.msra.mxu0 0
        %1552 = vmatprep.mubr.bf16.mxu0 0
        %1553 = vmatmul.mubr.bf16.gmra.mrb[0].mxu0 %v1515
        %v1554 = vpop.f32.mrb[0].mxu0
        %v1555 = vadd.f32 0.0, %v1554
        %v1556 = vpop.f32.mrb[0].mxu0
        %v1557 = vpop.f32.mrb[0].mxu0
        %v1558 = vpop.f32.mrb[0].mxu0
        %1559 = vdwg.mxu0
        %v1560 = vmul.f32 %v1417, 0.17677669
        %v1561 = vmul.f32 %v1463, 0.17677669
        %v1562 = vmul.f32 %v1509, 0.17677669
        %v1563 = vmul.f32 %v1555, 0.17677669
        %v1564 = vlaneseq
        %v1565 = vshrl.u32 %v1564, 7
        %v1566 = vlaneseq
        %v1567 = vand.u32 %v1566, 127
        %vm1568 = vcmp.le.s32.totalorder %v1567, %v1565
        %v1569 = vsel %vm1568, %v1560, -inf
        %v1570 = vsel %vm1568, %v1561, -inf
        %v1571 = vsel %vm1568, %v1562, -inf
        %v1572 = vsel %vm1568, %v1563, -inf
        %v1573 = vsel %vm1375, %v1569, -inf
        %1574 = vmax.xlane.f32.xlu0 %v1573
        %v1575 = vpop.xlane.xlu0 %1574
        %v1576 = vsel %vm1375, %v1570, -inf
        %1577 = vmax.xlane.f32.xlu0 %v1576
        %v1578 = vpop.xlane.xlu0 %1577
        %v1579 = vsel %vm1375, %v1571, -inf
        %1580 = vmax.xlane.f32.xlu0 %v1579
        %v1581 = vpop.xlane.xlu0 %1580
        %v1582 = vsel %vm1375, %v1572, -inf
        %1583 = vmax.xlane.f32.xlu0 %v1582
        %v1584 = vpop.xlane.xlu0 %1583
        %v1585 = vsub.f32 %v1569, %v1575
        %v1586 = vsub.f32 %v1570, %v1578
        %v1587 = vsub.f32 %v1571, %v1581
        %v1588 = vsub.f32 %v1572, %v1584
        %v1589 = vmul.f32 %v1585, 1.442695
        %v1590 = vpow.pop %v1589
        %v1591 = vmul.f32 %v1586, 1.442695
        %v1592 = vpow.pop %v1591
        %v1593 = vmul.f32 %v1587, 1.442695
        %v1594 = vpow.pop %v1593
        %v1595 = vmul.f32 %v1588, 1.442695
        %v1596 = vpow.pop %v1595
        %v1597 = vsel %vm1375, %v1590, 0.0
        %1598 = vadd.xlane.f32.xlu0 %v1597
        %v1599 = vpop.xlane.xlu0 %1598
        %v1600 = vsel %vm1375, %v1592, 0.0
        %1601 = vadd.xlane.f32.xlu0 %v1600
        %v1602 = vpop.xlane.xlu0 %1601
        %v1603 = vsel %vm1375, %v1594, 0.0
        %1604 = vadd.xlane.f32.xlu0 %v1603
        %v1605 = vpop.xlane.xlu0 %1604
        %v1606 = vsel %vm1375, %v1596, 0.0
        %1607 = vadd.xlane.f32.xlu0 %v1606
        %v1608 = vpop.xlane.xlu0 %1607
        %v1609 = vrcp.pop %v1599
        %v1610 = vrcp.pop %v1602
        %v1611 = vrcp.pop %v1605
        %v1612 = vrcp.pop %v1608
        %v1613 = vmul.f32 %v1590, %v1609
        %v1614 = vmul.f32 %v1592, %v1610
        %v1615 = vmul.f32 %v1594, %v1611
        %v1616 = vmul.f32 %v1596, %v1612
        %v1617 = vpack.c.bf16 %v1613, %v1613
        %v1618 = vpack.c.bf16 %v1614, %v1614
        %v1619 = vpack.c.bf16 %v1615, %v1615
        %v1620 = vpack.c.bf16 %v1616, %v1616
        %v1621 = vpack.c.bf16 %v1206, %v1206
        %v1622 = vpack.c.bf16 %v1258, %v1258
        %v1623 = vpack.c.bf16 %v1310, %v1310
        %v1624 = vpack.c.bf16 %v1362, %v1362
        %v1626 = vsel %vm1375, %v1617, 0
        %vm1628 = vcmask 1043456
        %v1630 = vsel %vm1628, %v1621, 0
        %1632 = vmatprep.subr.bf16.mxu0 0
        %1633 = vmatpush1.bf16.msra.mxu0 %v1630
        %1634 = vmatprep.subr.bf16.mxu0 0
        %1635 = vmatpush1.bf16.msra.mxu0 0
        %1636 = vmatprep.subr.bf16.mxu0 0
        %1637 = vmatpush1.bf16.msra.mxu0 0
        %1638 = vmatprep.subr.bf16.mxu0 0
        %1639 = vmatpush1.bf16.msra.mxu0 0
        %1640 = vmatprep.subr.bf16.mxu0 0
        %1641 = vmatpush1.bf16.msra.mxu0 0
        %1642 = vmatprep.subr.bf16.mxu0 0
        %1643 = vmatpush1.bf16.msra.mxu0 0
        %1644 = vmatprep.subr.bf16.mxu0 0
        %1645 = vmatpush1.bf16.msra.mxu0 0
        %1646 = vmatprep.subr.bf16.mxu0 0
        %1647 = vmatpush1.bf16.msra.mxu0 0
        %1648 = vmatprep.subr.bf16.mxu0 0
        %1649 = vmatpush1.bf16.msra.mxu0 0
        %1650 = vmatprep.subr.bf16.mxu0 0
        %1651 = vmatpush1.bf16.msra.mxu0 0
        %1652 = vmatprep.subr.bf16.mxu0 0
        %1653 = vmatpush1.bf16.msra.mxu0 0
        %1654 = vmatprep.subr.bf16.mxu0 0
        %1655 = vmatpush1.bf16.msra.mxu0 0
        %1656 = vmatprep.subr.bf16.mxu0 0
        %1657 = vmatpush1.bf16.msra.mxu0 0
        %1658 = vmatprep.subr.bf16.mxu0 0
        %1659 = vmatpush1.bf16.msra.mxu0 0
        %1660 = vmatprep.subr.bf16.mxu0 0
        %1661 = vmatpush1.bf16.msra.mxu0 0
        %1662 = vmatprep.subr.bf16.mxu0 0
        %1663 = vmatpush1.bf16.msra.mxu0 0
        %1664 = vmatprep.mubr.bf16.mxu0 0
        %1665 = vmatmul.mubr.bf16.gmra.mrb[0].mxu0 %v1626
        %v1666 = vpop.f32.mrb[0].mxu0
        %v1667 = vadd.f32 0.0, %v1666
        %v1668 = vpop.f32.mrb[0].mxu0
        %v1669 = vpop.f32.mrb[0].mxu0
        %v1670 = vpop.f32.mrb[0].mxu0
        %1671 = vdwg.mxu0
        %v1673 = vsel %vm1375, %v1618, 0
        %v1676 = vsel %vm1628, %v1622, 0
        %1678 = vmatprep.subr.bf16.mxu0 0
        %1679 = vmatpush1.bf16.msra.mxu0 %v1676
        %1680 = vmatprep.subr.bf16.mxu0 0
        %1681 = vmatpush1.bf16.msra.mxu0 0
        %1682 = vmatprep.subr.bf16.mxu0 0
        %1683 = vmatpush1.bf16.msra.mxu0 0
        %1684 = vmatprep.subr.bf16.mxu0 0
        %1685 = vmatpush1.bf16.msra.mxu0 0
        %1686 = vmatprep.subr.bf16.mxu0 0
        %1687 = vmatpush1.bf16.msra.mxu0 0
        %1688 = vmatprep.subr.bf16.mxu0 0
        %1689 = vmatpush1.bf16.msra.mxu0 0
        %1690 = vmatprep.subr.bf16.mxu0 0
        %1691 = vmatpush1.bf16.msra.mxu0 0
        %1692 = vmatprep.subr.bf16.mxu0 0
        %1693 = vmatpush1.bf16.msra.mxu0 0
        %1694 = vmatprep.subr.bf16.mxu0 0
        %1695 = vmatpush1.bf16.msra.mxu0 0
        %1696 = vmatprep.subr.bf16.mxu0 0
        %1697 = vmatpush1.bf16.msra.mxu0 0
        %1698 = vmatprep.subr.bf16.mxu0 0
        %1699 = vmatpush1.bf16.msra.mxu0 0
        %1700 = vmatprep.subr.bf16.mxu0 0
        %1701 = vmatpush1.bf16.msra.mxu0 0
        %1702 = vmatprep.subr.bf16.mxu0 0
        %1703 = vmatpush1.bf16.msra.mxu0 0
        %1704 = vmatprep.subr.bf16.mxu0 0
        %1705 = vmatpush1.bf16.msra.mxu0 0
        %1706 = vmatprep.subr.bf16.mxu0 0
        %1707 = vmatpush1.bf16.msra.mxu0 0
        %1708 = vmatprep.subr.bf16.mxu0 0
        %1709 = vmatpush1.bf16.msra.mxu0 0
        %1710 = vmatprep.mubr.bf16.mxu0 0
        %1711 = vmatmul.mubr.bf16.gmra.mrb[0].mxu0 %v1673
        %v1712 = vpop.f32.mrb[0].mxu0
        %v1713 = vadd.f32 0.0, %v1712
        %v1714 = vpop.f32.mrb[0].mxu0
        %v1715 = vpop.f32.mrb[0].mxu0
        %v1716 = vpop.f32.mrb[0].mxu0
        %1717 = vdwg.mxu0
        %v1719 = vsel %vm1375, %v1619, 0
        %v1722 = vsel %vm1628, %v1623, 0
        %1724 = vmatprep.subr.bf16.mxu0 0
        %1725 = vmatpush1.bf16.msra.mxu0 %v1722
        %1726 = vmatprep.subr.bf16.mxu0 0
        %1727 = vmatpush1.bf16.msra.mxu0 0
        %1728 = vmatprep.subr.bf16.mxu0 0
        %1729 = vmatpush1.bf16.msra.mxu0 0
        %1730 = vmatprep.subr.bf16.mxu0 0
        %1731 = vmatpush1.bf16.msra.mxu0 0
        %1732 = vmatprep.subr.bf16.mxu0 0
        %1733 = vmatpush1.bf16.msra.mxu0 0
        %1734 = vmatprep.subr.bf16.mxu0 0
        %1735 = vmatpush1.bf16.msra.mxu0 0
        %1736 = vmatprep.subr.bf16.mxu0 0
        %1737 = vmatpush1.bf16.msra.mxu0 0
        %1738 = vmatprep.subr.bf16.mxu0 0
        %1739 = vmatpush1.bf16.msra.mxu0 0
        %1740 = vmatprep.subr.bf16.mxu0 0
        %1741 = vmatpush1.bf16.msra.mxu0 0
        %1742 = vmatprep.subr.bf16.mxu0 0
        %1743 = vmatpush1.bf16.msra.mxu0 0
        %1744 = vmatprep.subr.bf16.mxu0 0
        %1745 = vmatpush1.bf16.msra.mxu0 0
        %1746 = vmatprep.subr.bf16.mxu0 0
        %1747 = vmatpush1.bf16.msra.mxu0 0
        %1748 = vmatprep.subr.bf16.mxu0 0
        %1749 = vmatpush1.bf16.msra.mxu0 0
        %1750 = vmatprep.subr.bf16.mxu0 0
        %1751 = vmatpush1.bf16.msra.mxu0 0
        %1752 = vmatprep.subr.bf16.mxu0 0
        %1753 = vmatpush1.bf16.msra.mxu0 0
        %1754 = vmatprep.subr.bf16.mxu0 0
        %1755 = vmatpush1.bf16.msra.mxu0 0
        %1756 = vmatprep.mubr.bf16.mxu0 0
        %1757 = vmatmul.mubr.bf16.gmra.mrb[0].mxu0 %v1719
        %v1758 = vpop.f32.mrb[0].mxu0
        %v1759 = vadd.f32 0.0, %v1758
        %v1760 = vpop.f32.mrb[0].mxu0
        %v1761 = vpop.f32.mrb[0].mxu0
        %v1762 = vpop.f32.mrb[0].mxu0
        %1763 = vdwg.mxu0
        %v1765 = vsel %vm1375, %v1620, 0
        %v1768 = vsel %vm1628, %v1624, 0
        %1770 = vmatprep.subr.bf16.mxu0 0
        %1771 = vmatpush1.bf16.msra.mxu0 %v1768
        %1772 = vmatprep.subr.bf16.mxu0 0
        %1773 = vmatpush1.bf16.msra.mxu0 0
        %1774 = vmatprep.subr.bf16.mxu0 0
        %1775 = vmatpush1.bf16.msra.mxu0 0
        %1776 = vmatprep.subr.bf16.mxu0 0
        %1777 = vmatpush1.bf16.msra.mxu0 0
        %1778 = vmatprep.subr.bf16.mxu0 0
        %1779 = vmatpush1.bf16.msra.mxu0 0
        %1780 = vmatprep.subr.bf16.mxu0 0
        %1781 = vmatpush1.bf16.msra.mxu0 0
        %1782 = vmatprep.subr.bf16.mxu0 0
        %1783 = vmatpush1.bf16.msra.mxu0 0
        %1784 = vmatprep.subr.bf16.mxu0 0
        %1785 = vmatpush1.bf16.msra.mxu0 0
        %1786 = vmatprep.subr.bf16.mxu0 0
        %1787 = vmatpush1.bf16.msra.mxu0 0
        %1788 = vmatprep.subr.bf16.mxu0 0
        %1789 = vmatpush1.bf16.msra.mxu0 0
        %1790 = vmatprep.subr.bf16.mxu0 0
        %1791 = vmatpush1.bf16.msra.mxu0 0
        %1792 = vmatprep.subr.bf16.mxu0 0
        %1793 = vmatpush1.bf16.msra.mxu0 0
        %1794 = vmatprep.subr.bf16.mxu0 0
        %1795 = vmatpush1.bf16.msra.mxu0 0
        %1796 = vmatprep.subr.bf16.mxu0 0
        %1797 = vmatpush1.bf16.msra.mxu0 0
        %1798 = vmatprep.subr.bf16.mxu0 0
        %1799 = vmatpush1.bf16.msra.mxu0 0
        %1800 = vmatprep.subr.bf16.mxu0 0
        %1801 = vmatpush1.bf16.msra.mxu0 0
        %1802 = vmatprep.mubr.bf16.mxu0 0
        %1803 = vmatmul.mubr.bf16.gmra.mrb[0].mxu0 %v1765
        %v1804 = vpop.f32.mrb[0].mxu0
        %v1805 = vadd.f32 0.0, %v1804
        %v1806 = vpop.f32.mrb[0].mxu0
        %v1807 = vpop.f32.mrb[0].mxu0
        %v1808 = vpop.f32.mrb[0].mxu0
        %1809 = vdwg.mxu0
        %v1810 = vpack.c.bf16 %v1667, %v1667
        %v1811 = vpack.c.bf16 %v1713, %v1713
        %v1812 = vpack.c.bf16 %v1759, %v1759
        %v1813 = vpack.c.bf16 %v1805, %v1805
        %v1814 = vld [vmem:[#allocation13] sm:$0xf]
        %v1815 = vld [vmem:[#allocation13 + $0x4] sm:$0xf]
        %v1816 = vld [vmem:[#allocation13 + $0x8] sm:$0xf]
        %v1817 = vld [vmem:[#allocation13 + $0xc] sm:$0xf]
        %v1819 = vsel %vm1375, %v1810, 0
        %v1822 = vsel %vm1628, %v1814, 0
        %1824 = vmatprep.subr.bf16.mxu0 0
        %1825 = vmatpush1.bf16.msra.mxu0 %v1822
        %1826 = vmatprep.subr.bf16.mxu0 0
        %1827 = vmatpush1.bf16.msra.mxu0 0
        %1828 = vmatprep.subr.bf16.mxu0 0
        %1829 = vmatpush1.bf16.msra.mxu0 0
        %1830 = vmatprep.subr.bf16.mxu0 0
        %1831 = vmatpush1.bf16.msra.mxu0 0
        %1832 = vmatprep.subr.bf16.mxu0 0
        %1833 = vmatpush1.bf16.msra.mxu0 0
        %1834 = vmatprep.subr.bf16.mxu0 0
        %1835 = vmatpush1.bf16.msra.mxu0 0
        %1836 = vmatprep.subr.bf16.mxu0 0
        %1837 = vmatpush1.bf16.msra.mxu0 0
        %1838 = vmatprep.subr.bf16.mxu0 0
        %1839 = vmatpush1.bf16.msra.mxu0 0
        %1840 = vmatprep.subr.bf16.mxu0 0
        %1841 = vmatpush1.bf16.msra.mxu0 0
        %1842 = vmatprep.subr.bf16.mxu0 0
        %1843 = vmatpush1.bf16.msra.mxu0 0
        %1844 = vmatprep.subr.bf16.mxu0 0
        %1845 = vmatpush1.bf16.msra.mxu0 0
        %1846 = vmatprep.subr.bf16.mxu0 0
        %1847 = vmatpush1.bf16.msra.mxu0 0
        %1848 = vmatprep.subr.bf16.mxu0 0
        %1849 = vmatpush1.bf16.msra.mxu0 0
        %1850 = vmatprep.subr.bf16.mxu0 0
        %1851 = vmatpush1.bf16.msra.mxu0 0
        %1852 = vmatprep.subr.bf16.mxu0 0
        %1853 = vmatpush1.bf16.msra.mxu0 0
        %1854 = vmatprep.subr.bf16.mxu0 0
        %1855 = vmatpush1.bf16.msra.mxu0 0
        %1856 = vmatprep.mubr.bf16.mxu0 0
        %1857 = vmatmul.mubr.bf16.gmra.mrb[0].mxu0 %v1819
        %v1858 = vpop.f32.mrb[0].mxu0
        %v1859 = vadd.f32 0.0, %v1858
        %v1860 = vpop.f32.mrb[0].mxu0
        %v1861 = vpop.f32.mrb[0].mxu0
        %v1862 = vpop.f32.mrb[0].mxu0
        %1863 = vdwg.mxu0
        %v1865 = vsel %vm1375, %v1811, 0
        %v1868 = vsel %vm1628, %v1815, 0
        %1870 = vmatprep.subr.bf16.mxu0 0
        %1871 = vmatpush1.bf16.msra.mxu0 %v1868
        %1872 = vmatprep.subr.bf16.mxu0 0
        %1873 = vmatpush1.bf16.msra.mxu0 0
        %1874 = vmatprep.subr.bf16.mxu0 0
        %1875 = vmatpush1.bf16.msra.mxu0 0
        %1876 = vmatprep.subr.bf16.mxu0 0
        %1877 = vmatpush1.bf16.msra.mxu0 0
        %1878 = vmatprep.subr.bf16.mxu0 0
        %1879 = vmatpush1.bf16.msra.mxu0 0
        %1880 = vmatprep.subr.bf16.mxu0 0
        %1881 = vmatpush1.bf16.msra.mxu0 0
        %1882 = vmatprep.subr.bf16.mxu0 0
        %1883 = vmatpush1.bf16.msra.mxu0 0
        %1884 = vmatprep.subr.bf16.mxu0 0
        %1885 = vmatpush1.bf16.msra.mxu0 0
        %1886 = vmatprep.subr.bf16.mxu0 0
        %1887 = vmatpush1.bf16.msra.mxu0 0
        %1888 = vmatprep.subr.bf16.mxu0 0
        %1889 = vmatpush1.bf16.msra.mxu0 0
        %1890 = vmatprep.subr.bf16.mxu0 0
        %1891 = vmatpush1.bf16.msra.mxu0 0
        %1892 = vmatprep.subr.bf16.mxu0 0
        %1893 = vmatpush1.bf16.msra.mxu0 0
        %1894 = vmatprep.subr.bf16.mxu0 0
        %1895 = vmatpush1.bf16.msra.mxu0 0
        %1896 = vmatprep.subr.bf16.mxu0 0
        %1897 = vmatpush1.bf16.msra.mxu0 0
        %1898 = vmatprep.subr.bf16.mxu0 0
        %1899 = vmatpush1.bf16.msra.mxu0 0
        %1900 = vmatprep.subr.bf16.mxu0 0
        %1901 = vmatpush1.bf16.msra.mxu0 0
        %1902 = vmatprep.mubr.bf16.mxu0 0
        %1903 = vmatmul.mubr.bf16.gmra.mrb[0].mxu0 %v1865
        %v1904 = vpop.f32.mrb[0].mxu0
        %v1905 = vadd.f32 0.0, %v1904
        %v1906 = vpop.f32.mrb[0].mxu0
        %v1907 = vpop.f32.mrb[0].mxu0
        %v1908 = vpop.f32.mrb[0].mxu0
        %1909 = vdwg.mxu0
        %v1911 = vsel %vm1375, %v1812, 0
        %v1914 = vsel %vm1628, %v1816, 0
        %1916 = vmatprep.subr.bf16.mxu0 0
        %1917 = vmatpush1.bf16.msra.mxu0 %v1914
        %1918 = vmatprep.subr.bf16.mxu0 0
        %1919 = vmatpush1.bf16.msra.mxu0 0
        %1920 = vmatprep.subr.bf16.mxu0 0
        %1921 = vmatpush1.bf16.msra.mxu0 0
        %1922 = vmatprep.subr.bf16.mxu0 0
        %1923 = vmatpush1.bf16.msra.mxu0 0
        %1924 = vmatprep.subr.bf16.mxu0 0
        %1925 = vmatpush1.bf16.msra.mxu0 0
        %1926 = vmatprep.subr.bf16.mxu0 0
        %1927 = vmatpush1.bf16.msra.mxu0 0
        %1928 = vmatprep.subr.bf16.mxu0 0
        %1929 = vmatpush1.bf16.msra.mxu0 0
        %1930 = vmatprep.subr.bf16.mxu0 0
        %1931 = vmatpush1.bf16.msra.mxu0 0
        %1932 = vmatprep.subr.bf16.mxu0 0
        %1933 = vmatpush1.bf16.msra.mxu0 0
        %1934 = vmatprep.subr.bf16.mxu0 0
        %1935 = vmatpush1.bf16.msra.mxu0 0
        %1936 = vmatprep.subr.bf16.mxu0 0
        %1937 = vmatpush1.bf16.msra.mxu0 0
        %1938 = vmatprep.subr.bf16.mxu0 0
        %1939 = vmatpush1.bf16.msra.mxu0 0
        %1940 = vmatprep.subr.bf16.mxu0 0
        %1941 = vmatpush1.bf16.msra.mxu0 0
        %1942 = vmatprep.subr.bf16.mxu0 0
        %1943 = vmatpush1.bf16.msra.mxu0 0
        %1944 = vmatprep.subr.bf16.mxu0 0
        %1945 = vmatpush1.bf16.msra.mxu0 0
        %1946 = vmatprep.subr.bf16.mxu0 0
        %1947 = vmatpush1.bf16.msra.mxu0 0
        %1948 = vmatprep.mubr.bf16.mxu0 0
        %1949 = vmatmul.mubr.bf16.gmra.mrb[0].mxu0 %v1911
        %v1950 = vpop.f32.mrb[0].mxu0
        %v1951 = vadd.f32 0.0, %v1950
        %v1952 = vpop.f32.mrb[0].mxu0
        %v1953 = vpop.f32.mrb[0].mxu0
        %v1954 = vpop.f32.mrb[0].mxu0
        %1955 = vdwg.mxu0
        %v1957 = vsel %vm1375, %v1813, 0
        %v1960 = vsel %vm1628, %v1817, 0
        %1962 = vmatprep.subr.bf16.mxu0 0
        %1963 = vmatpush1.bf16.msra.mxu0 %v1960
        %1964 = vmatprep.subr.bf16.mxu0 0
        %1965 = vmatpush1.bf16.msra.mxu0 0
        %1966 = vmatprep.subr.bf16.mxu0 0
        %1967 = vmatpush1.bf16.msra.mxu0 0
        %1968 = vmatprep.subr.bf16.mxu0 0
        %1969 = vmatpush1.bf16.msra.mxu0 0
        %1970 = vmatprep.subr.bf16.mxu0 0
        %1971 = vmatpush1.bf16.msra.mxu0 0
        %1972 = vmatprep.subr.bf16.mxu0 0
        %1973 = vmatpush1.bf16.msra.mxu0 0
        %1974 = vmatprep.subr.bf16.mxu0 0
        %1975 = vmatpush1.bf16.msra.mxu0 0
        %1976 = vmatprep.subr.bf16.mxu0 0
        %1977 = vmatpush1.bf16.msra.mxu0 0
        %1978 = vmatprep.subr.bf16.mxu0 0
        %1979 = vmatpush1.bf16.msra.mxu0 0
        %1980 = vmatprep.subr.bf16.mxu0 0
        %1981 = vmatpush1.bf16.msra.mxu0 0
        %1982 = vmatprep.subr.bf16.mxu0 0
        %1983 = vmatpush1.bf16.msra.mxu0 0
        %1984 = vmatprep.subr.bf16.mxu0 0
        %1985 = vmatpush1.bf16.msra.mxu0 0
        %1986 = vmatprep.subr.bf16.mxu0 0
        %1987 = vmatpush1.bf16.msra.mxu0 0
        %1988 = vmatprep.subr.bf16.mxu0 0
        %1989 = vmatpush1.bf16.msra.mxu0 0
        %1990 = vmatprep.subr.bf16.mxu0 0
        %1991 = vmatpush1.bf16.msra.mxu0 0
        %1992 = vmatprep.subr.bf16.mxu0 0
        %1993 = vmatpush1.bf16.msra.mxu0 0
        %1994 = vmatprep.mubr.bf16.mxu0 0
        %1995 = vmatmul.mubr.bf16.gmra.mrb[0].mxu0 %v1957
        %v1996 = vpop.f32.mrb[0].mxu0
        %v1997 = vadd.f32 0.0, %v1996
        %v1998 = vpop.f32.mrb[0].mxu0
        %v1999 = vpop.f32.mrb[0].mxu0
        %v2000 = vpop.f32.mrb[0].mxu0
        %2001 = vdwg.mxu0
        %v2002 = vsel %vm660, %v1859, 0.0
        %v2003 = vsel %vm660, %v1905, 0.0
        %v2004 = vadd.f32 %v2002, %v2003
        %v2005 = vsel %vm660, %v1951, 0.0
        %v2006 = vadd.f32 %v2004, %v2005
        %v2007 = vsel %vm660, %v1997, 0.0
        %v2008 = vadd.f32 %v2006, %v2007
        %v2009 = vld [vmem:[#allocation14] sm:$0x1]
        %v2011 = vlaneseq
        %v2012 = vshrl.u32 %v2011, 7
        %v2013 = vsub.s32 0, %v2012
        %v2014 = vrot.slane %v2009, %v2013
        %v2016 = vadd.f32 %v2008, %v2014
        %v2017 = vadd.f32 %v659, %v2016
        %v2018 = vsel %vm660, %v2017, 0.0
        %2019 = vadd.xlane.f32.xlu0 %v2018
        %v2020 = vpop.xlane.xlu0 %2019
        %v2021 = vmul.f32 %v2020, %v664
        %v2022 = vsub.f32 %v2017, %v2021
        %v2023 = vmul.f32 %v2022, %v2022
        %v2024 = vsel %vm660, %v2023, 0.0
        %2025 = vadd.xlane.f32.xlu0 %v2024
        %v2026 = vpop.xlane.xlu0 %2025
        %v2027 = vmul.f32 %v2026, %v664
        %v2028 = vadd.f32 %v2027, 1e-05
        %v2029 = vrsqrt.pop %v2028
        %v2030 = vmul.f32 %v2022, %v2029
        %v2031 = vld [vmem:[#allocation16] sm:$0x1]
        %v2033 = vlaneseq
        %v2034 = vshrl.u32 %v2033, 7
        %v2035 = vsub.s32 0, %v2034
        %v2036 = vrot.slane %v2031, %v2035
        %v2038 = vmul.f32 %v2030, %v2036
        %v2039 = vld [vmem:[#allocation17] sm:$0x1]
        %v2041 = vlaneseq
        %v2042 = vshrl.u32 %v2041, 7
        %v2043 = vsub.s32 0, %v2042
        %v2044 = vrot.slane %v2039, %v2043
        %v2046 = vadd.f32 %v2038, %v2044
        %v2047 = vpack.c.bf16 %v2046, %v2046
        %v2048 = vld [vmem:[#allocation19] sm:$0xf]
        %v2049 = vld [vmem:[#allocation19 + $0x4] sm:$0xf]
        %v2050 = vld [vmem:[#allocation19 + $0x8] sm:$0xf]
        %v2051 = vld [vmem:[#allocation19 + $0xc] sm:$0xf]
        %v2052 = vld [vmem:[#allocation20] sm:$0x1]
        %v2054 = vlaneseq
        %v2055 = vshrl.u32 %v2054, 7
        %v2056 = vsub.s32 0, %v2055
        %v2057 = vrot.slane %v2052, %v2056
        %v2063 = vunpack.c.l.b16 %v2048
        %v2064 = vunpack.c.l.b16 %v2049
        %v2065 = vunpack.c.l.b16 %v2050
        %v2066 = vunpack.c.l.b16 %v2051
        %v2067 = vpack.c.b16 %v2064, %v2063
        %v2068 = vpack.c.b16 %v2066, %v2065
        %v2072 = vsel %vm660, %v2047, 0
        %2074 = vmatprep.subr.bf16.mxu0 0
        %2075 = vmatpush1.bf16.msra.mxu0 %v2067
        %2076 = vmatprep.subr.bf16.mxu0 0
        %2077 = vmatpush1.bf16.msra.mxu0 %v2068
        %2078 = vmatprep.subr.bf16.mxu0 0
        %2079 = vmatpush1.bf16.msra.mxu0 0
        %2080 = vmatprep.subr.bf16.mxu0 0
        %2081 = vmatpush1.bf16.msra.mxu0 0
        %2082 = vmatprep.subr.bf16.mxu0 0
        %2083 = vmatpush1.bf16.msra.mxu0 0
        %2084 = vmatprep.subr.bf16.mxu0 0
        %2085 = vmatpush1.bf16.msra.mxu0 0
        %2086 = vmatprep.subr.bf16.mxu0 0
        %2087 = vmatpush1.bf16.msra.mxu0 0
        %2088 = vmatprep.subr.bf16.mxu0 0
        %2089 = vmatpush1.bf16.msra.mxu0 0
        %2090 = vmatprep.subr.bf16.mxu0 0
        %2091 = vmatpush1.bf16.msra.mxu0 0
        %2092 = vmatprep.subr.bf16.mxu0 0
        %2093 = vmatpush1.bf16.msra.mxu0 0
        %2094 = vmatprep.subr.bf16.mxu0 0
        %2095 = vmatpush1.bf16.msra.mxu0 0
        %2096 = vmatprep.subr.bf16.mxu0 0
        %2097 = vmatpush1.bf16.msra.mxu0 0
        %2098 = vmatprep.subr.bf16.mxu0 0
        %2099 = vmatpush1.bf16.msra.mxu0 0
        %2100 = vmatprep.subr.bf16.mxu0 0
        %2101 = vmatpush1.bf16.msra.mxu0 0
        %2102 = vmatprep.subr.bf16.mxu0 0
        %2103 = vmatpush1.bf16.msra.mxu0 0
        %2104 = vmatprep.subr.bf16.mxu0 0
        %2105 = vmatpush1.bf16.msra.mxu0 0
        %2106 = vmatprep.mubr.bf16.mxu0 0
        %2107 = vmatmul.mubr.bf16.gmra.mrb[0].mxu0 %v2072
        %v2108 = vpop.f32.mrb[0].mxu0
        %v2109 = vadd.f32 %v2057, %v2108
        %v2110 = vpop.f32.mrb[0].mxu0
        %v2111 = vpop.f32.mrb[0].mxu0
        %v2112 = vpop.f32.mrb[0].mxu0
        %2113 = vdwg.mxu0
        %v2114 = vmax.f32 %v2109, 0.0
        %v2115 = vpack.c.bf16 %v2114, %v2114
        %v2116 = vld [vmem:[#allocation22] sm:$0xf]
        %v2117 = vld [vmem:[#allocation22 + $0x4] sm:$0xf]
        %v2118 = vld [vmem:[#allocation22 + $0x8] sm:$0xf]
        %v2119 = vld [vmem:[#allocation22 + $0xc] sm:$0xf]
        %v2120 = vld [vmem:[#allocation22 + $0x10] sm:$0xf]
        %v2121 = vld [vmem:[#allocation22 + $0x14] sm:$0xf]
        %v2122 = vld [vmem:[#allocation22 + $0x18] sm:$0xf]
        %v2123 = vld [vmem:[#allocation22 + $0x1c] sm:$0xf]
        %v2124 = vld [vmem:[#allocation22 + $0x20] sm:$0xf]
        %v2125 = vld [vmem:[#allocation22 + $0x24] sm:$0xf]
        %v2126 = vld [vmem:[#allocation22 + $0x28] sm:$0xf]
        %v2127 = vld [vmem:[#allocation22 + $0x2c] sm:$0xf]
        %v2128 = vld [vmem:[#allocation22 + $0x30] sm:$0xf]
        %v2129 = vld [vmem:[#allocation22 + $0x34] sm:$0xf]
        %v2130 = vld [vmem:[#allocation22 + $0x38] sm:$0xf]
        %v2131 = vld [vmem:[#allocation22 + $0x3c] sm:$0xf]
        %v2132 = vld [vmem:[#allocation23] sm:$0x1]
        %v2134 = vlaneseq
        %v2135 = vshrl.u32 %v2134, 7
        %v2136 = vsub.s32 0, %v2135
        %v2137 = vrot.slane %v2132, %v2136
        %v2155 = vunpack.c.l.b16 %v2116
        %v2156 = vunpack.c.l.b16 %v2117
        %v2157 = vunpack.c.l.b16 %v2118
        %v2158 = vunpack.c.l.b16 %v2119
        %v2159 = vunpack.c.l.b16 %v2120
        %v2160 = vunpack.c.l.b16 %v2121
        %v2161 = vunpack.c.l.b16 %v2122
        %v2162 = vunpack.c.l.b16 %v2123
        %v2163 = vunpack.c.l.b16 %v2124
        %v2164 = vunpack.c.l.b16 %v2125
        %v2165 = vunpack.c.l.b16 %v2126
        %v2166 = vunpack.c.l.b16 %v2127
        %v2167 = vunpack.c.l.b16 %v2128
        %v2168 = vunpack.c.l.b16 %v2129
        %v2169 = vunpack.c.l.b16 %v2130
        %v2170 = vunpack.c.l.b16 %v2131
        %v2171 = vpack.c.b16 %v2156, %v2155
        %v2172 = vpack.c.b16 %v2158, %v2157
        %v2173 = vpack.c.b16 %v2160, %v2159
        %v2174 = vpack.c.b16 %v2162, %v2161
        %v2175 = vpack.c.b16 %v2164, %v2163
        %v2176 = vpack.c.b16 %v2166, %v2165
        %v2177 = vpack.c.b16 %v2168, %v2167
        %v2178 = vpack.c.b16 %v2170, %v2169
        %2187 = vmatprep.subr.bf16.mxu0 0
        %2188 = vmatpush1.bf16.msra.mxu0 %v2171
        %2189 = vmatprep.subr.bf16.mxu0 0
        %2190 = vmatpush1.bf16.msra.mxu0 %v2172
        %2191 = vmatprep.subr.bf16.mxu0 0
        %2192 = vmatpush1.bf16.msra.mxu0 %v2173
        %2193 = vmatprep.subr.bf16.mxu0 0
        %2194 = vmatpush1.bf16.msra.mxu0 %v2174
        %2195 = vmatprep.subr.bf16.mxu0 0
        %2196 = vmatpush1.bf16.msra.mxu0 %v2175
        %2197 = vmatprep.subr.bf16.mxu0 0
        %2198 = vmatpush1.bf16.msra.mxu0 %v2176
        %2199 = vmatprep.subr.bf16.mxu0 0
        %2200 = vmatpush1.bf16.msra.mxu0 %v2177
        %2201 = vmatprep.subr.bf16.mxu0 0
        %2202 = vmatpush1.bf16.msra.mxu0 %v2178
        %2203 = vmatprep.subr.bf16.mxu0 0
        %2204 = vmatpush1.bf16.msra.mxu0 0
        %2205 = vmatprep.subr.bf16.mxu0 0
        %2206 = vmatpush1.bf16.msra.mxu0 0
        %2207 = vmatprep.subr.bf16.mxu0 0
        %2208 = vmatpush1.bf16.msra.mxu0 0
        %2209 = vmatprep.subr.bf16.mxu0 0
        %2210 = vmatpush1.bf16.msra.mxu0 0
        %2211 = vmatprep.subr.bf16.mxu0 0
        %2212 = vmatpush1.bf16.msra.mxu0 0
        %2213 = vmatprep.subr.bf16.mxu0 0
        %2214 = vmatpush1.bf16.msra.mxu0 0
        %2215 = vmatprep.subr.bf16.mxu0 0
        %2216 = vmatpush1.bf16.msra.mxu0 0
        %2217 = vmatprep.subr.bf16.mxu0 0
        %2218 = vmatpush1.bf16.msra.mxu0 0
        %2219 = vmatprep.mubr.bf16.mxu0 0
        %2220 = vmatmul.mubr.bf16.gmra.mrb[0].mxu0 %v2115
        %v2221 = vpop.f32.mrb[0].mxu0
        %v2222 = vadd.f32 %v2137, %v2221
        %v2223 = vpop.f32.mrb[0].mxu0
        %v2224 = vpop.f32.mrb[0].mxu0
        %v2225 = vpop.f32.mrb[0].mxu0
        %2226 = vdwg.mxu0
        %v2227 = vadd.f32 %v2017, %v2222
        %2228 = vst.msk [vmem:[%s657] sm:$0xff] %vm660, %v2227
        %s2229 = sand.u32 %s345, 1
        %s2230 = scalar_lea.sflag [#allocation4], %s2229
        %s2231 = sand.u32 %s345, 1
        %s2232 = smul.addr %s2231, 8
        %s2233 = scalar_lea.vmem [#allocation25], %s2232
        // Predicated region
        $region133: #{tpu_custom_call.1} parent=75 // pred_check
          %p2234 = pneg %p355
        $region134: #{tpu_custom_call.1} parent=75 // pred_check_branch
          %2236 = sbr.rel (%p2234) target = $region136
        $region135: #{tpu_custom_call.1} parent=75 // pred_region
          %s2238 = ssub.s32 128, 128
          %2239 = vsyncadd %s2230, %s2238
          %s2240 = smul.addr %s38, 128
          %s2241 = scalar_lea.hbm %s14, %s2240
          %s2243 = sshll.u32 %s2233, 4
          %s2244 = int_to_ptr.vmem [resolvable:$true] %s2243
          %2246 = dma.vmem_to_hbm [thread:$0]  %s2244, 128, %s2241, %s2230
        $region136: #{tpu_custom_call.1} parent=75 // pred_fallthru
          _
      $region76: #{tpu_custom_call.1} parent=5 // pred_fallthru
        _
      %p2247 = scmp.le.s32.totalorder 2, %s33
      // Predicated region
      $region137: #{tpu_custom_call.1} parent=5 // pred_check
        %p2248 = pneg %p2247
      $region138: #{tpu_custom_call.1} parent=5 // pred_check_branch
        %2250 = sbr.rel (%p2248) target = $region140
      $region139: #{tpu_custom_call.1} parent=5 // pred_region
        %s2251 = ssub.s32 %s33, 2
        // Predicated region
        $region141: #{tpu_custom_call.1} parent=139 // pred_check
          %p2252 = pneg %p361
        $region142: #{tpu_custom_call.1} parent=139 // pred_check_branch
          %2254 = sbr.rel (%p2252) target = $region144
        $region143: #{tpu_custom_call.1} parent=139 // pred_region
          %s2255 = sand.u32 %s346, 1
          %s2256 = scalar_lea.sflag [#allocation4], %s2255
          %s2257 = sand.u32 %s346, 1
          %s2258 = smul.addr %s2257, 8
          %s2259 = scalar_lea.vmem [#allocation25], %s2258
          %2260 = dma.done %s2256, 128
        $region144: #{tpu_custom_call.1} parent=139 // pred_fallthru
          _
      $region140: #{tpu_custom_call.1} parent=5 // pred_fallthru
        _
    $region6: #{tpu_custom_call.1} parent=1 // loop_footer
      %s37 = sadd.s32 1, %s33
    $region7: #{tpu_custom_call.1} parent=1 // loop_footer_branch
      %32 = sbr.rel target = $region3
    $region8: #{tpu_custom_call.1} parent=1 // loop_exit
      _
    %2261 = vsyncpa [#allocation3], 1
    %s2262 = scalar_lea.sflag [#allocation3], 1
    %2263 = vsyncpa %s2262, 1
    %2264 = vsyncpa [#allocation6], 1
    %2265 = vsyncpa [#allocation9], 1
    %2266 = vsyncpa [#allocation12], 1
    %2267 = vsyncpa [#allocation15], 1
    %2268 = vsyncpa [#allocation18], 1
    %2269 = vsyncpa [#allocation21], 1
    %2270 = vsyncpa [#allocation24], 1
    %2271 = vsyncpa [#allocation4], 1
    %s2272 = scalar_lea.sflag [#allocation4], 1
    %2273 = vsyncpa %s2272, 1

</llo_original>
